<compile_context>
chip_gen: v5e
topology: v5e:2x2
jax: 0.10.0
libtpu: 0.0.40
codegen_flags: <defaults>
</compile_context>

<pallas_src>
import jax
import jax.numpy as jnp
from jax.experimental import pallas as pl
from jax.experimental.pallas import tpu as pltpu


# ----------------------------------------------------------------------------
# Kernels
# ----------------------------------------------------------------------------

def _sae_fwd_resident_kernel(x_ref, w_enc_ref, b_enc_ref, w_dec_ref, b_dec_ref,
                             xhat_ref, fx_ref):
    """Weights fully VMEM-resident; grid = (batch tiles,)."""
    h_pre = jnp.dot(x_ref[...], w_enc_ref[...],
                    preferred_element_type=jnp.float32) + b_enc_ref[...]
    f_x = jnp.maximum(h_pre, 0.0)
    fx_ref[...] = f_x.astype(fx_ref.dtype)
    x_hat = jnp.dot(f_x.astype(w_dec_ref.dtype), w_dec_ref[...],
                    preferred_element_type=jnp.float32) + b_dec_ref[...]
    xhat_ref[...] = x_hat.astype(xhat_ref.dtype)


def _sae_fwd_streamed_kernel(x_ref, w_enc_ref, b_enc_ref, w_dec_ref, b_dec_ref,
                             xhat_ref, fx_ref, acc_ref):
    """Weights streamed along d_sae; grid = (batch tiles, d_sae tiles).

    x_hat is accumulated across the d_sae axis in an f32 VMEM scratch; b_dec is
    added exactly once in the finalize step.
    """
    j = pl.program_id(1)

    @pl.when(j == 0)
    def _():
        acc_ref[...] = jnp.zeros_like(acc_ref)

    h_pre = jnp.dot(x_ref[...], w_enc_ref[...],
                    preferred_element_type=jnp.float32) + b_enc_ref[...]
    f_x = jnp.maximum(h_pre, 0.0)
    fx_ref[...] = f_x.astype(fx_ref.dtype)
    acc_ref[...] += jnp.dot(f_x.astype(w_dec_ref.dtype), w_dec_ref[...],
                            preferred_element_type=jnp.float32)

    @pl.when(j == pl.num_programs(1) - 1)
    def _():
        xhat_ref[...] = (acc_ref[...] + b_dec_ref[...]).astype(xhat_ref.dtype)


# ----------------------------------------------------------------------------
# Tiling / VMEM heuristics
# ----------------------------------------------------------------------------

def _pick_tile(total, target, multiple):
    """Largest t <= target that divides `total` and is a multiple of `multiple`.
    Falls back to the full extent (always a legal block shape)."""
    t = min(target, total)
    t -= t % multiple
    while t >= multiple:
        if total % t == 0:
            return t
        t -= multiple
    return total


def _resident_vmem_bytes(tb, d_vit, d_sae, cdt_bytes, out_bytes):
    w = 2 * 2 * d_vit * d_sae * cdt_bytes            # W_enc + W_dec, double-buffered
    x_io = 2 * tb * d_vit * cdt_bytes
    fx_io = 2 * tb * d_sae * out_bytes
    xhat_io = 2 * tb * d_vit * out_bytes
    bias = 2 * (d_sae + d_vit) * 4
    return w + x_io + fx_io + xhat_io + bias


def _streamed_vmem_bytes(tb, ts, d_vit, cdt_bytes, out_bytes):
    w = 2 * 2 * d_vit * ts * cdt_bytes                # W_enc / W_dec chunks, double-buffered
    x_io = 2 * tb * d_vit * cdt_bytes
    fx_io = 2 * tb * ts * out_bytes
    xhat_io = 2 * tb * d_vit * out_bytes
    acc = tb * d_vit * 4
    bias = 2 * (ts + d_vit) * 4
    return w + x_io + fx_io + xhat_io + acc + bias


# ----------------------------------------------------------------------------
# Wrapper
# ----------------------------------------------------------------------------

def sae_forward(x, w_enc, b_enc, w_dec, b_dec, *,
                tb=None, ts=None,
                compute_dtype=jnp.bfloat16,
                out_dtype=None,
                strategy="auto",
                vmem_budget_bytes=48 << 20,
                vmem_limit_bytes=None):
    """Fused SAE forward. x: (batch, d_vit). Returns (x_hat, f_x)."""
    batch, d_vit = x.shape
    d_vit_e, d_sae = w_enc.shape
    assert d_vit_e == d_vit and w_dec.shape == (d_sae, d_vit)

    out_dtype = x.dtype if out_dtype is None else out_dtype
    cdt_bytes = jnp.dtype(compute_dtype).itemsize
    out_bytes = jnp.dtype(out_dtype).itemsize

    # --- batch tile: large enough to fill the MXU, a multiple of 16 so it is
    # legal for both f32 and bf16 layouts.
    if tb is None:
        tb = _pick_tile(batch, 256, 16)
        # Prefer >= 2 grid steps on the parallel axis (v7x has 2 TCs/chip).
        if batch // tb == 1 and batch >= 256 and (batch // 2) % 16 == 0:
            tb = batch // 2
    assert batch % tb == 0, "batch must be divisible by the batch tile"

    # --- strategy selection
    if strategy == "auto":
        resident_need = _resident_vmem_bytes(tb, d_vit, d_sae, cdt_bytes, out_bytes)
        strategy = "resident" if resident_need <= vmem_budget_bytes else "streamed"

    # --- cast once in the wrapper (halves weight DMA / residency for bf16);
    # biases stay f32 and are added to the f32 accumulator.
    x_c = x.astype(compute_dtype)
    w_enc_c = w_enc.astype(compute_dtype)
    w_dec_c = w_dec.astype(compute_dtype)
    b_enc2 = b_enc.reshape(1, d_sae).astype(jnp.float32)
    b_dec2 = b_dec.reshape(1, d_vit).astype(jnp.float32)

    out_shapes = (
        jax.ShapeDtypeStruct((batch, d_vit), out_dtype),   # x_hat
        jax.ShapeDtypeStruct((batch, d_sae), out_dtype),   # f_x
    )

    if strategy == "resident":
        need = _resident_vmem_bytes(tb, d_vit, d_sae, cdt_bytes, out_bytes)
        limit = vmem_limit_bytes or int(min(max(2 * need, 32 << 20), 64 << 20))
        grid_spec = pltpu.PrefetchScalarGridSpec(
            num_scalar_prefetch=0,
            grid=(batch // tb,),
            in_specs=[
                pl.BlockSpec((tb, d_vit), lambda i: (i, 0)),      # x tile
                pl.BlockSpec((d_vit, d_sae), lambda i: (0, 0)),   # W_enc (resident)
                pl.BlockSpec((1, d_sae), lambda i: (0, 0)),       # b_enc
                pl.BlockSpec((d_sae, d_vit), lambda i: (0, 0)),   # W_dec (resident)
                pl.BlockSpec((1, d_vit), lambda i: (0, 0)),       # b_dec
            ],
            out_specs=[
                pl.BlockSpec((tb, d_vit), lambda i: (i, 0)),      # x_hat tile
                pl.BlockSpec((tb, d_sae), lambda i: (i, 0)),      # f_x tile
            ],
        )
        return pl.pallas_call(
            _sae_fwd_resident_kernel,
            out_shape=out_shapes,
            grid_spec=grid_spec,
            compiler_params=pltpu.CompilerParams(
                dimension_semantics=("parallel",),
                vmem_limit_bytes=limit),
        )(x_c, w_enc_c, b_enc2, w_dec_c, b_dec2)

    # --- streamed d_sae strategy
    if ts is None:
        for target in (4096, 2048, 1024, 512, 256, 128):
            ts = _pick_tile(d_sae, target, 128)
            if _streamed_vmem_bytes(tb, ts, d_vit, cdt_bytes, out_bytes) <= vmem_budget_bytes:
                break
    assert d_sae % ts == 0, "d_sae must be divisible by the d_sae tile"
    assert ts % 128 == 0 or ts == d_sae

    need = _streamed_vmem_bytes(tb, ts, d_vit, cdt_bytes, out_bytes)
    limit = vmem_limit_bytes or int(min(max(2 * need, 32 << 20), 64 << 20))

    grid_spec = pltpu.PrefetchScalarGridSpec(
        num_scalar_prefetch=0,
        grid=(batch // tb, d_sae // ts),
        in_specs=[
            pl.BlockSpec((tb, d_vit), lambda i, j: (i, 0)),    # x tile (resident over j)
            pl.BlockSpec((d_vit, ts), lambda i, j: (0, j)),    # W_enc column chunk
            pl.BlockSpec((1, ts), lambda i, j: (0, j)),        # b_enc chunk
            pl.BlockSpec((ts, d_vit), lambda i, j: (j, 0)),    # W_dec row chunk
            pl.BlockSpec((1, d_vit), lambda i, j: (0, 0)),     # b_dec
        ],
        out_specs=[
            pl.BlockSpec((tb, d_vit), lambda i, j: (i, 0)),    # x_hat (accumulated over j)
            pl.BlockSpec((tb, ts), lambda i, j: (i, j)),       # f_x tile
        ],
        scratch_shapes=[pltpu.VMEM((tb, d_vit), jnp.float32)],  # x_hat accumulator
    )
    return pl.pallas_call(
        _sae_fwd_streamed_kernel,
        out_shape=out_shapes,
        grid_spec=grid_spec,
        compiler_params=pltpu.CompilerParams(
            dimension_semantics=("parallel", "arbitrary"),
            vmem_limit_bytes=limit),
    )(x_c, w_enc_c, b_enc2, w_dec_c, b_dec2)


# ----------------------------------------------------------------------------
# Parameter init (matches the PyTorch module's __init__)
# ----------------------------------------------------------------------------

def init_sae_params(key, d_vit, d_sae, dtype=jnp.float32):
    """kaiming_uniform_ (a=0, fan_in mode -> fan_in = shape[1], leaky_relu gain)
    on (d_vit, d_sae) / (d_sae, d_vit); b_enc / b_dec zero; W_dec rows
    normalized to unit norm (normalize_w_dec with cfg.normalize_w_dec=True)."""
    k_enc, k_dec = jax.random.split(key)

    def kaiming_uniform(k, shape):
        fan_in = shape[1]
        gain = jnp.sqrt(2.0)                      # leaky_relu gain with a=0
        bound = gain * jnp.sqrt(3.0 / fan_in)
        return jax.random.uniform(k, shape, dtype, minval=-bound, maxval=bound)

    w_enc = kaiming_uniform(k_enc, (d_vit, d_sae))
    b_enc = jnp.zeros((d_sae,), dtype)
    w_dec = kaiming_uniform(k_dec, (d_sae, d_vit))
    w_dec = w_dec / jnp.linalg.norm(w_dec, axis=1, keepdims=True)
    b_dec = jnp.zeros((d_vit,), dtype)
    return w_enc, b_enc, w_dec, b_dec


def sae_reference(x, w_enc, b_enc, w_dec, b_dec, compute_dtype):
    """Plain-JAX reference using the same casts as the kernel."""
    cd = compute_dtype
    h = jnp.dot(x.astype(cd), w_enc.astype(cd),
                preferred_element_type=jnp.float32,
                precision=jax.lax.Precision.HIGHEST) + b_enc.astype(jnp.float32)
    f = jnp.maximum(h, 0.0)
    xh = jnp.dot(f.astype(cd), w_dec.astype(cd),
                 preferred_element_type=jnp.float32,
                 precision=jax.lax.Precision.HIGHEST) + b_dec.astype(jnp.float32)
    return xh, f


# ----------------------------------------------------------------------------
# Self-test
# ----------------------------------------------------------------------------

if __name__ == "__main__":
    # Small, TPU-tile-friendly shapes consistent with the module:
    # d_vit=128, exp_factor=4 -> d_sae=512, batch=512.
    batch, d_vit, exp_factor = 512, 128, 4
    d_sae = d_vit * exp_factor

    key = jax.random.PRNGKey(0)
    k_x, k_params = jax.random.split(key)

    x = jax.random.normal(k_x, (batch, d_vit), dtype=jnp.float32)
    w_enc, b_enc, w_dec, b_dec = init_sae_params(k_params, d_vit, d_sae)

    # 1) f32 compute, resident-weight path (tight check).
    xh32, fx32 = sae_forward(x, w_enc, b_enc, w_dec, b_dec,
                             compute_dtype=jnp.float32, strategy="resident", tb=256)
    jax.block_until_ready((xh32, fx32))
    xh_ref32, fx_ref32 = sae_reference(x, w_enc, b_enc, w_dec, b_dec, jnp.float32)
    assert xh32.shape == (batch, d_vit) and fx32.shape == (batch, d_sae)
    assert jnp.allclose(fx32.astype(jnp.float32), fx_ref32, atol=5e-3, rtol=5e-3)
    assert jnp.allclose(xh32.astype(jnp.float32), xh_ref32, atol=5e-3, rtol=5e-3)

    # 2) bf16 compute, streamed d_sae path with VMEM accumulator (the scalable path).
    xh16, fx16 = sae_forward(x, w_enc, b_enc, w_dec, b_dec,
                             compute_dtype=jnp.bfloat16, strategy="streamed",
                             tb=256, ts=256)
    jax.block_until_ready((xh16, fx16))
    xh_ref16, fx_ref16 = sae_reference(x, w_enc, b_enc, w_dec, b_dec, jnp.bfloat16)
    assert jnp.allclose(fx16.astype(jnp.float32), fx_ref16, atol=2e-2, rtol=2e-2)
    assert jnp.allclose(xh16.astype(jnp.float32), xh_ref16, atol=2e-2, rtol=2e-2)

    # 3) Default "auto" path (bf16 compute, strategy picked from VMEM budget).
    xh_a, fx_a = sae_forward(x, w_enc, b_enc, w_dec, b_dec)
    jax.block_until_ready((xh_a, fx_a))
    assert jnp.allclose(fx_a.astype(jnp.float32), fx_ref16, atol=2e-2, rtol=2e-2)
    assert jnp.allclose(xh_a.astype(jnp.float32), xh_ref16, atol=2e-2, rtol=2e-2)

    print("KERNEL_OK")
</pallas_src>

<mosaic_0001>
module attributes {stable_mosaic.version = 11 : i64} {
  func.func @_sae_fwd_resident_kernel(%arg0: i32, %arg1: memref<256x128xf32, #tpu.memory_space<vmem>>, %arg2: memref<128x512xf32, #tpu.memory_space<vmem>>, %arg3: memref<1x512xf32, #tpu.memory_space<vmem>>, %arg4: memref<512x128xf32, #tpu.memory_space<vmem>>, %arg5: memref<1x128xf32, #tpu.memory_space<vmem>>, %arg6: memref<256x128xf32, #tpu.memory_space<vmem>>, %arg7: memref<256x512xf32, #tpu.memory_space<vmem>>) attributes {dimension_semantics = [#tpu.dimension_semantics<parallel>], iteration_bounds = array<i64: 2>, scalar_prefetch = 0 : i64, scratch_operands = 0 : i64, tpu.core_type = #tpu.core_type<tc>, window_params = [{transform_indices = @transform_0, window_bounds = array<i64: 256, 128>}, {pipeline_mode = #tpu.pipeline_mode<synchronous>, transform_indices = @transform_1, window_bounds = array<i64: 128, 512>}, {pipeline_mode = #tpu.pipeline_mode<synchronous>, transform_indices = @transform_2, window_bounds = array<i64: 1, 512>}, {pipeline_mode = #tpu.pipeline_mode<synchronous>, transform_indices = @transform_3, window_bounds = array<i64: 512, 128>}, {pipeline_mode = #tpu.pipeline_mode<synchronous>, transform_indices = @transform_4, window_bounds = array<i64: 1, 128>}, {transform_indices = @transform_5, window_bounds = array<i64: 256, 128>}, {transform_indices = @transform_6, window_bounds = array<i64: 256, 512>}]} {
    %c0 = arith.constant 0 : index
    %c0_0 = arith.constant 0 : index
    %0 = vector.load %arg1[%c0, %c0_0] : memref<256x128xf32, #tpu.memory_space<vmem>>, vector<256x128xf32>
    %c0_1 = arith.constant 0 : index
    %c0_2 = arith.constant 0 : index
    %1 = vector.load %arg2[%c0_1, %c0_2] : memref<128x512xf32, #tpu.memory_space<vmem>>, vector<128x512xf32>
    %cst = arith.constant dense<0.000000e+00> : vector<256x512xf32>
    %2 = tpu.matmul %0, %1, %cst {dimension_numbers = #tpu.dot_dimension_numbers<[1], [0], [0], [1], [0, 0, 1, 1], [], []>} : vector<256x128xf32>, vector<128x512xf32>, vector<256x512xf32> -> vector<256x512xf32>
    %c0_3 = arith.constant 0 : index
    %c0_4 = arith.constant 0 : index
    %3 = vector.load %arg3[%c0_3, %c0_4] : memref<1x512xf32, #tpu.memory_space<vmem>>, vector<1x512xf32>
    %4 = vector.broadcast %3 : vector<1x512xf32> to vector<256x512xf32>
    %5 = arith.addf %2, %4 : vector<256x512xf32>
    %cst_5 = arith.constant 0.000000e+00 : f32
    %6 = vector.broadcast %cst_5 : f32 to vector<256x512xf32>
    %7 = arith.maximumf %5, %6 : vector<256x512xf32>
    %c0_6 = arith.constant 0 : index
    %c0_7 = arith.constant 0 : index
    %8 = vector.load %arg7[%c0_6, %c0_7] : memref<256x512xf32, #tpu.memory_space<vmem>>, vector<256x512xf32>
    tpu.vector_store %arg7[%c0_6, %c0_7], %7 {strides = array<i32>} : memref<256x512xf32, #tpu.memory_space<vmem>>, vector<256x512xf32>,
    %c0_8 = arith.constant 0 : index
    %c0_9 = arith.constant 0 : index
    %9 = vector.load %arg4[%c0_8, %c0_9] : memref<512x128xf32, #tpu.memory_space<vmem>>, vector<512x128xf32>
    %cst_10 = arith.constant dense<0.000000e+00> : vector<256x128xf32>
    %10 = tpu.matmul %7, %9, %cst_10 {dimension_numbers = #tpu.dot_dimension_numbers<[1], [0], [0], [1], [0, 0, 1, 1], [], []>} : vector<256x512xf32>, vector<512x128xf32>, vector<256x128xf32> -> vector<256x128xf32>
    %c0_11 = arith.constant 0 : index
    %c0_12 = arith.constant 0 : index
    %11 = vector.load %arg5[%c0_11, %c0_12] : memref<1x128xf32, #tpu.memory_space<vmem>>, vector<1x128xf32>
    %12 = vector.broadcast %11 : vector<1x128xf32> to vector<256x128xf32>
    %13 = arith.addf %10, %12 : vector<256x128xf32>
    %c0_13 = arith.constant 0 : index
    %c0_14 = arith.constant 0 : index
    %14 = vector.load %arg6[%c0_13, %c0_14] : memref<256x128xf32, #tpu.memory_space<vmem>>, vector<256x128xf32>
    tpu.vector_store %arg6[%c0_13, %c0_14], %13 {strides = array<i32>} : memref<256x128xf32, #tpu.memory_space<vmem>>, vector<256x128xf32>,
    return
  }
  func.func @transform_0(%arg0: i32) -> (i32, i32) {
    %c0_i32 = arith.constant 0 : i32
    %c0_i32_0 = arith.constant 0 : i32
    return %arg0, %c0_i32 : i32, i32
  }
  func.func @transform_1(%arg0: i32) -> (i32, i32) {
    %c0_i32 = arith.constant 0 : i32
    %c0_i32_0 = arith.constant 0 : i32
    %c0_i32_1 = arith.constant 0 : i32
    return %c0_i32, %c0_i32_0 : i32, i32
  }
  func.func @transform_2(%arg0: i32) -> (i32, i32) {
    %c0_i32 = arith.constant 0 : i32
    %c0_i32_0 = arith.constant 0 : i32
    %c0_i32_1 = arith.constant 0 : i32
    return %c0_i32, %c0_i32_0 : i32, i32
  }
  func.func @transform_3(%arg0: i32) -> (i32, i32) {
    %c0_i32 = arith.constant 0 : i32
    %c0_i32_0 = arith.constant 0 : i32
    %c0_i32_1 = arith.constant 0 : i32
    return %c0_i32, %c0_i32_0 : i32, i32
  }
  func.func @transform_4(%arg0: i32) -> (i32, i32) {
    %c0_i32 = arith.constant 0 : i32
    %c0_i32_0 = arith.constant 0 : i32
    %c0_i32_1 = arith.constant 0 : i32
    return %c0_i32, %c0_i32_0 : i32, i32
  }
  func.func @transform_5(%arg0: i32) -> (i32, i32) {
    %c0_i32 = arith.constant 0 : i32
    %c0_i32_0 = arith.constant 0 : i32
    return %arg0, %c0_i32 : i32, i32
  }
  func.func @transform_6(%arg0: i32) -> (i32, i32) {
    %c0_i32 = arith.constant 0 : i32
    %c0_i32_0 = arith.constant 0 : i32
    return %arg0, %c0_i32 : i32, i32
  }
}

</mosaic_0001>

<llo_original>
// kernel: tpu_custom_call.1
$region0: #{tpu_custom_call.1}
  #allocation0 [shape = 'u32[]', space=smem, size = 0x4, offset = 0x4, fixed_abs, tag = 'smem constant byte address 0x4 - core index']
  #allocation1 [shape = 'u32[72,128]{1,0:T(1,128)}', space=vmem, size = 0x9000, scoped, tag = 'internal scratch']
  %s0 = inlined_call_operand.hbm [shape: f32[512,128], index: 0, kind: input, shape index: {}]
  %s1 = inlined_call_operand.hbm [shape: f32[128,512], index: 1, kind: input, shape index: {}]
  %s2 = inlined_call_operand.hbm [shape: f32[1,512], index: 2, kind: input, shape index: {}]
  %s3 = inlined_call_operand.hbm [shape: f32[512,128], index: 3, kind: input, shape index: {}]
  %s4 = inlined_call_operand.vmem [shape: f32[1,128], index: 4, kind: input, shape index: {}]
  %s5 = inlined_call_operand.hbm [shape: f32[512,128], index: 5, kind: output, shape index: {0}]
  %s6 = inlined_call_operand.hbm [shape: f32[512,512], index: 6, kind: output, shape index: {1}]
  %7 = xla_tuple %s5, %s6
  %s8 = sld [smem:[#allocation0]]
  $region77: #{tpu_custom_call.1} parent=0
    _
  %s10 = ssub.s32 1, %s8
  %s11 = scalar_select 0, %s10, %s8
  $region1: #{tpu_custom_call.1} parent=0
    #allocation2 [shape = 'u8[262144]{0}', space=vmem, size = 0x40000, scoped, tag = 'input window, operand 0']
    #allocation3 [shape = 's32[2]{0}', space=sflag, size = 0x8, scoped, tag = 'scoped memory for tpu_custom_call.1']
    #allocation4 [shape = 's32[2]{0}', space=sflag, size = 0x8, scoped, tag = 'scoped memory for tpu_custom_call.1']
    #allocation5 [shape = 'u8[262144]{0}', space=vmem, size = 0x40000, scoped, tag = 'input window, operand 1, single buffered']
    #allocation6 [shape = 's32[1]{0}', space=sflag, size = 0x4, scoped, tag = 'scoped memory for tpu_custom_call.1']
    #allocation7 [shape = 'u8[2048]{0}', space=vmem, size = 0x800, scoped, tag = 'input window, operand 2, single buffered']
    #allocation8 [shape = 'u8[262144]{0}', space=vmem, size = 0x40000, scoped, tag = 'input window, operand 3, single buffered']
    #allocation9 [shape = 's32[1]{0}', space=sflag, size = 0x4, scoped, tag = 'scoped memory for tpu_custom_call.1']
    #allocation10 [shape = 'u8[262144]{0}', space=vmem, size = 0x40000, scoped, tag = 'output window, operand 0']
    #allocation11 [shape = 'u8[1048576]{0}', space=vmem, size = 0x100000, scoped, tag = 'output window, operand 1']
    #allocation12 [shape = 's32[2]{0}', space=sflag, size = 0x8, scoped, tag = 'scoped memory for tpu_custom_call.1']
    %12 = vsyncpa [#allocation3], 0
    %s13 = scalar_lea.sflag [#allocation3], 1
    %14 = vsyncpa %s13, 0
    %15 = vsyncpa [#allocation6], 0
    %16 = vsyncpa [#allocation9], 0
    %17 = vsyncpa [#allocation4], 0
    %s18 = scalar_lea.sflag [#allocation4], 1
    %19 = vsyncpa %s18, 0
    %20 = vsyncpa [#allocation12], 0
    %s21 = scalar_lea.sflag [#allocation12], 1
    %22 = vsyncpa %s21, 0
    loop: start=0, step=1, limit=4
    $region2: #{tpu_custom_call.1} parent=1 // loop_pre_header
      _
    $region3: #{tpu_custom_call.1} parent=1 // loop_header
      %s24 = sphi 0, %s28
      %p25 = scmp.ge.s32.totalorder %s24, 4
      %s34 = sphi 0, %s36
      %s37 = sphi 0, %s34
      %s38 = sphi 0, %s37
      %s54 = sphi 0, %s38
      %s58 = sphi 0, %s58
      %s60 = sphi 0, %s58
      %s61 = sphi 0, %s60
      %s75 = sphi 0, %s61
      %s79 = sphi 0, %s79
      %s81 = sphi 0, %s79
      %s82 = sphi 0, %s81
      %s96 = sphi 0, %s82
      %s100 = sphi 0, %s100
      %s102 = sphi 0, %s100
      %s103 = sphi 0, %s102
      %s117 = sphi 0, %s103
      %s121 = sphi 0, %s121
      %s123 = sphi 0, %s121
      %s124 = sphi 0, %s123
      %s138 = sphi 0, %s124
      %s144 = sphi 0, %s146
      %s147 = sphi 0, %s144
      %s148 = sphi 0, %s147
      %s164 = sphi 0, %s148
      %s170 = sphi 0, %s172
      %s173 = sphi 0, %s170
      %s174 = sphi 0, %s173
      %s190 = sphi 0, %s174
    $region4: #{tpu_custom_call.1} parent=1 // loop_header_branch
      %27 = sbr.rel (%p25) target = $region8
    $region5: #{tpu_custom_call.1} parent=1 // loop_body
      %s29 = ssub.s32 %s24, 1
      %s30 = ssub.s32 %s24, 2
      %s31 = sadd.s32 %s24, 1
      %s32 = ssub.s32 %s24, %s31
      %p33 = scmp.eq.s32.totalorder %s32, 0
      %s35 = sadd.s32 %s34, 1
      %s36 = scalar_select %p33, %s34, %s35
      %p39 = pneg %p33
      %p40 = scmp.eq.s32.totalorder %s24, 1
      %p41 = por %p39, %p40
      %p42 = scmp.ne.s32.totalorder %s34, %s37
      %p43 = scmp.eq.s32.totalorder %s24, 0
      %p44 = por %p42, %p43
      %p45 = scmp.ne.s32.totalorder %s34, %s37
      %p46 = scmp.eq.s32.totalorder %s29, 1
      %p47 = por %p45, %p46
      %p48 = scmp.ne.s32.totalorder %s37, %s38
      %p49 = scmp.eq.s32.totalorder %s29, 0
      %p50 = por %p48, %p49
      %p51 = scmp.ne.s32.totalorder %s37, %s38
      %p52 = scmp.eq.s32.totalorder %s30, 1
      %p53 = por %p51, %p52
      %p55 = scmp.ne.s32.totalorder %s38, %s54
      %p56 = scmp.eq.s32.totalorder %s30, 0
      %p57 = por %p55, %p56
      %s59 = sadd.s32 %s58, 1
      %p62 = scmp.eq.s32.totalorder %s24, 1
      %p63 = scmp.ne.s32.totalorder %s58, %s60
      %p64 = scmp.eq.s32.totalorder %s24, 0
      %p65 = por %p63, %p64
      %p66 = scmp.ne.s32.totalorder %s58, %s60
      %p67 = scmp.eq.s32.totalorder %s29, 1
      %p68 = por %p66, %p67
      %p69 = scmp.ne.s32.totalorder %s60, %s61
      %p70 = scmp.eq.s32.totalorder %s29, 0
      %p71 = por %p69, %p70
      %p72 = scmp.ne.s32.totalorder %s60, %s61
      %p73 = scmp.eq.s32.totalorder %s30, 1
      %p74 = por %p72, %p73
      %p76 = scmp.ne.s32.totalorder %s61, %s75
      %p77 = scmp.eq.s32.totalorder %s30, 0
      %p78 = por %p76, %p77
      %s80 = sadd.s32 %s79, 1
      %p83 = scmp.eq.s32.totalorder %s24, 1
      %p84 = scmp.ne.s32.totalorder %s79, %s81
      %p85 = scmp.eq.s32.totalorder %s24, 0
      %p86 = por %p84, %p85
      %p87 = scmp.ne.s32.totalorder %s79, %s81
      %p88 = scmp.eq.s32.totalorder %s29, 1
      %p89 = por %p87, %p88
      %p90 = scmp.ne.s32.totalorder %s81, %s82
      %p91 = scmp.eq.s32.totalorder %s29, 0
      %p92 = por %p90, %p91
      %p93 = scmp.ne.s32.totalorder %s81, %s82
      %p94 = scmp.eq.s32.totalorder %s30, 1
      %p95 = por %p93, %p94
      %p97 = scmp.ne.s32.totalorder %s82, %s96
      %p98 = scmp.eq.s32.totalorder %s30, 0
      %p99 = por %p97, %p98
      %s101 = sadd.s32 %s100, 1
      %p104 = scmp.eq.s32.totalorder %s24, 1
      %p105 = scmp.ne.s32.totalorder %s100, %s102
      %p106 = scmp.eq.s32.totalorder %s24, 0
      %p107 = por %p105, %p106
      %p108 = scmp.ne.s32.totalorder %s100, %s102
      %p109 = scmp.eq.s32.totalorder %s29, 1
      %p110 = por %p108, %p109
      %p111 = scmp.ne.s32.totalorder %s102, %s103
      %p112 = scmp.eq.s32.totalorder %s29, 0
      %p113 = por %p111, %p112
      %p114 = scmp.ne.s32.totalorder %s102, %s103
      %p115 = scmp.eq.s32.totalorder %s30, 1
      %p116 = por %p114, %p115
      %p118 = scmp.ne.s32.totalorder %s103, %s117
      %p119 = scmp.eq.s32.totalorder %s30, 0
      %p120 = por %p118, %p119
      %s122 = sadd.s32 %s121, 1
      %p125 = scmp.eq.s32.totalorder %s24, 1
      %p126 = scmp.ne.s32.totalorder %s121, %s123
      %p127 = scmp.eq.s32.totalorder %s24, 0
      %p128 = por %p126, %p127
      %p129 = scmp.ne.s32.totalorder %s121, %s123
      %p130 = scmp.eq.s32.totalorder %s29, 1
      %p131 = por %p129, %p130
      %p132 = scmp.ne.s32.totalorder %s123, %s124
      %p133 = scmp.eq.s32.totalorder %s29, 0
      %p134 = por %p132, %p133
      %p135 = scmp.ne.s32.totalorder %s123, %s124
      %p136 = scmp.eq.s32.totalorder %s30, 1
      %p137 = por %p135, %p136
      %p139 = scmp.ne.s32.totalorder %s124, %s138
      %p140 = scmp.eq.s32.totalorder %s30, 0
      %p141 = por %p139, %p140
      %s142 = ssub.s32 %s24, %s31
      %p143 = scmp.eq.s32.totalorder %s142, 0
      %s145 = sadd.s32 %s144, 1
      %s146 = scalar_select %p143, %s144, %s145
      %p149 = pneg %p143
      %p150 = scmp.eq.s32.totalorder %s24, 1
      %p151 = por %p149, %p150
      %p152 = scmp.ne.s32.totalorder %s144, %s147
      %p153 = scmp.eq.s32.totalorder %s24, 0
      %p154 = por %p152, %p153
      %p155 = scmp.ne.s32.totalorder %s144, %s147
      %p156 = scmp.eq.s32.totalorder %s29, 1
      %p157 = por %p155, %p156
      %p158 = scmp.ne.s32.totalorder %s147, %s148
      %p159 = scmp.eq.s32.totalorder %s29, 0
      %p160 = por %p158, %p159
      %p161 = scmp.ne.s32.totalorder %s147, %s148
      %p162 = scmp.eq.s32.totalorder %s30, 1
      %p163 = por %p161, %p162
      %p165 = scmp.ne.s32.totalorder %s148, %s164
      %p166 = scmp.eq.s32.totalorder %s30, 0
      %p167 = por %p165, %p166
      %s168 = ssub.s32 %s24, %s31
      %p169 = scmp.eq.s32.totalorder %s168, 0
      %s171 = sadd.s32 %s170, 1
      %s172 = scalar_select %p169, %s170, %s171
      %p175 = pneg %p169
      %p176 = scmp.eq.s32.totalorder %s24, 1
      %p177 = por %p175, %p176
      %p178 = scmp.ne.s32.totalorder %s170, %s173
      %p179 = scmp.eq.s32.totalorder %s24, 0
      %p180 = por %p178, %p179
      %p181 = scmp.ne.s32.totalorder %s170, %s173
      %p182 = scmp.eq.s32.totalorder %s29, 1
      %p183 = por %p181, %p182
      %p184 = scmp.ne.s32.totalorder %s173, %s174
      %p185 = scmp.eq.s32.totalorder %s29, 0
      %p186 = por %p184, %p185
      %p187 = scmp.ne.s32.totalorder %s173, %s174
      %p188 = scmp.eq.s32.totalorder %s30, 1
      %p189 = por %p187, %p188
      %p191 = scmp.ne.s32.totalorder %s174, %s190
      %p192 = scmp.eq.s32.totalorder %s30, 0
      %p193 = por %p191, %p192
      %p194 = scmp.le.s32.totalorder 1, %s24
      %p195 = scmp.lt.s32.totalorder %s24, 3
      %p196 = pnand %p194, %p195
      %p197 = pneg %p196
      // Predicated region
      $region9: #{tpu_custom_call.1} parent=5 // pred_check
        _
      $region10: #{tpu_custom_call.1} parent=5 // pred_check_branch
        %199 = sbr.rel (%p196) target = $region12
      $region11: #{tpu_custom_call.1} parent=5 // pred_region
        %s200 = ssub.s32 %s24, 1
        // Predicated region
        $region13: #{tpu_custom_call.1} parent=11 // pred_check
          %p201 = pneg %p71
        $region14: #{tpu_custom_call.1} parent=11 // pred_check_branch
          %203 = sbr.rel (%p201) target = $region16
        $region15: #{tpu_custom_call.1} parent=11 // pred_region
          %205 = vsyncadd [#allocation6], 0
          %s206 = sshll.u32 %s1, 4
          %s207 = int_to_ptr.hbm [resolvable:$true] %s206
          %s208 = sshll.u32 [#allocation5], 4
          %s209 = int_to_ptr.vmem [resolvable:$true] %s208
          %214 = dma.hbm_to_vmem [thread:$0]  %s207, 8192, %s209, [#allocation6], 512, 512, 32
        $region16: #{tpu_custom_call.1} parent=11 // pred_fallthru
          _
        // Predicated region
        $region17: #{tpu_custom_call.1} parent=11 // pred_check
          %p215 = pneg %p92
        $region18: #{tpu_custom_call.1} parent=11 // pred_check_branch
          %217 = sbr.rel (%p215) target = $region20
        $region19: #{tpu_custom_call.1} parent=11 // pred_region
          %219 = vsyncadd [#allocation6], 0
          %s221 = sshll.u32 %s2, 4
          %s222 = int_to_ptr.hbm [resolvable:$true] %s221
          %s223 = sshll.u32 [#allocation7], 4
          %s224 = int_to_ptr.vmem [resolvable:$true] %s223
          %226 = dma.hbm_to_vmem [thread:$0]  %s222, 64, %s224, [#allocation6]
        $region20: #{tpu_custom_call.1} parent=11 // pred_fallthru
          _
        // Predicated region
        $region21: #{tpu_custom_call.1} parent=11 // pred_check
          %p227 = pneg %p113
        $region22: #{tpu_custom_call.1} parent=11 // pred_check_branch
          %229 = sbr.rel (%p227) target = $region24
        $region23: #{tpu_custom_call.1} parent=11 // pred_region
          %231 = vsyncadd [#allocation9], 0
          %s232 = sshll.u32 %s3, 4
          %s233 = int_to_ptr.hbm [resolvable:$true] %s232
          %s234 = sshll.u32 [#allocation8], 4
          %s235 = int_to_ptr.vmem [resolvable:$true] %s234
          %240 = dma.hbm_to_vmem [thread:$0]  %s233, 8192, %s235, [#allocation9], 128, 128, 8
        $region24: #{tpu_custom_call.1} parent=11 // pred_fallthru
          _
        // Predicated region
        $region25: #{tpu_custom_call.1} parent=11 // pred_check
          %p241 = pneg %p134
        $region26: #{tpu_custom_call.1} parent=11 // pred_check_branch
          %243 = sbr.rel (%p241) target = $region28
        $region27: #{tpu_custom_call.1} parent=11 // pred_region
          _
        $region28: #{tpu_custom_call.1} parent=11 // pred_fallthru
          _
      $region12: #{tpu_custom_call.1} parent=5 // pred_fallthru
        _
      %p244 = scmp.lt.s32.totalorder %s24, 2
      // Predicated region
      $region29: #{tpu_custom_call.1} parent=5 // pred_check
        %p245 = pneg %p244
      $region30: #{tpu_custom_call.1} parent=5 // pred_check_branch
        %247 = sbr.rel (%p245) target = $region32
      $region31: #{tpu_custom_call.1} parent=5 // pred_region
        // Predicated region
        $region33: #{tpu_custom_call.1} parent=31 // pred_check
          %p248 = pneg %p44
        $region34: #{tpu_custom_call.1} parent=31 // pred_check_branch
          %250 = sbr.rel (%p248) target = $region36
        $region35: #{tpu_custom_call.1} parent=31 // pred_region
          %s251 = sand.u32 %s34, 1
          %s252 = scalar_lea.sflag [#allocation3], %s251
          %s253 = sand.u32 %s34, 1
          %s254 = smul.addr %s253, 256
          %s255 = scalar_lea.vmem [#allocation2], %s254
          %s256 = smul.u32 32, %s24
          %258 = vsyncadd %s252, 0
          %s259 = smul.addr %s256, 8
          %s260 = scalar_lea.hbm %s0, %s259
          %s261 = sshll.u32 %s260, 4
          %s262 = int_to_ptr.hbm [resolvable:$true] %s261
          %s263 = sshll.u32 %s255, 4
          %s264 = int_to_ptr.vmem [resolvable:$true] %s263
          %269 = dma.hbm_to_vmem [thread:$0]  %s262, 4096, %s264, %s252, 128, 128, 8
        $region36: #{tpu_custom_call.1} parent=31 // pred_fallthru
          _
      $region32: #{tpu_custom_call.1} parent=5 // pred_fallthru
        _
      %p270 = scmp.le.s32.totalorder 1, %s24
      %p271 = scmp.lt.s32.totalorder %s24, 3
      %p272 = pnand %p270, %p271
      %p273 = pneg %p272
      // Predicated region
      $region37: #{tpu_custom_call.1} parent=5 // pred_check
        _
      $region38: #{tpu_custom_call.1} parent=5 // pred_check_branch
        %275 = sbr.rel (%p272) target = $region40
      $region39: #{tpu_custom_call.1} parent=5 // pred_region
        %s276 = ssub.s32 %s24, 1
        %s277 = sand.u32 %s37, 1
        %s278 = scalar_lea.sflag [#allocation3], %s277
        %s279 = sand.u32 %s37, 1
        %s280 = smul.addr %s279, 256
        %s281 = scalar_lea.vmem [#allocation2], %s280
        // Predicated region
        $region41: #{tpu_custom_call.1} parent=39 // pred_check
          %p282 = pneg %p50
        $region42: #{tpu_custom_call.1} parent=39 // pred_check_branch
          %284 = sbr.rel (%p282) target = $region44
        $region43: #{tpu_custom_call.1} parent=39 // pred_region
          %286 = dma.done %s278, 4096
        $region44: #{tpu_custom_call.1} parent=39 // pred_fallthru
          _
        // Predicated region
        $region45: #{tpu_custom_call.1} parent=39 // pred_check
          %p287 = pneg %p71
        $region46: #{tpu_custom_call.1} parent=39 // pred_check_branch
          %289 = sbr.rel (%p287) target = $region48
        $region47: #{tpu_custom_call.1} parent=39 // pred_region
          %291 = dma.done [#allocation6], 8192
        $region48: #{tpu_custom_call.1} parent=39 // pred_fallthru
          _
        // Predicated region
        $region49: #{tpu_custom_call.1} parent=39 // pred_check
          %p292 = pneg %p92
        $region50: #{tpu_custom_call.1} parent=39 // pred_check_branch
          %294 = sbr.rel (%p292) target = $region52
        $region51: #{tpu_custom_call.1} parent=39 // pred_region
          %296 = dma.done [#allocation6], 64
        $region52: #{tpu_custom_call.1} parent=39 // pred_fallthru
          _
        // Predicated region
        $region53: #{tpu_custom_call.1} parent=39 // pred_check
          %p297 = pneg %p113
        $region54: #{tpu_custom_call.1} parent=39 // pred_check_branch
          %299 = sbr.rel (%p297) target = $region56
        $region55: #{tpu_custom_call.1} parent=39 // pred_region
          %301 = dma.done [#allocation9], 8192
        $region56: #{tpu_custom_call.1} parent=39 // pred_fallthru
          _
        %s302 = sand.u32 %s37, 1
        %s303 = scalar_lea.sflag [#allocation3], %s302
        %s304 = sand.u32 %s37, 1
        %s305 = smul.addr %s304, 256
        %s306 = scalar_lea.vmem [#allocation2], %s305
        %p307 = pneg %p50
        %p308 = pneg %p47
        %p309 = pneg %p71
        %p310 = pneg %p68
        %p311 = pneg %p92
        %p312 = pneg %p89
        %p313 = pneg %p113
        %p314 = pneg %p110
        %p315 = pneg %p134
        %p316 = pneg %p131
        %p317 = pneg %p160
        %p318 = pneg %p157
        %s319 = sand.u32 %s147, 1
        %s320 = scalar_lea.sflag [#allocation4], %s319
        %s321 = sand.u32 %s147, 1
        %s322 = smul.addr %s321, 256
        %s323 = scalar_lea.vmem [#allocation10], %s322
        %p324 = pneg %p186
        %p325 = pneg %p183
        %s326 = sand.u32 %s173, 1
        %s327 = scalar_lea.sflag [#allocation12], %s326
        %s328 = sand.u32 %s173, 1
        %s329 = smul.addr %s328, 1024
        %s330 = scalar_lea.vmem [#allocation11], %s329
        %s331 = smul.u32 32, %s29
        %s332 = smul.u32 32, %s29
        %s333 = smul.u32 32, %s29
        %v334 = vld [vmem:[%s281] sm:$0xff]
        %v335 = vld [vmem:[%s281 + $0x8] sm:$0xff]
        %v336 = vld [vmem:[%s281 + $0x10] sm:$0xff]
        %v337 = vld [vmem:[%s281 + $0x18] sm:$0xff]
        %v338 = vld [vmem:[%s281 + $0x20] sm:$0xff]
        %v339 = vld [vmem:[%s281 + $0x28] sm:$0xff]
        %v340 = vld [vmem:[%s281 + $0x30] sm:$0xff]
        %v341 = vld [vmem:[%s281 + $0x38] sm:$0xff]
        %v342 = vld [vmem:[%s281 + $0x40] sm:$0xff]
        %v343 = vld [vmem:[%s281 + $0x48] sm:$0xff]
        %v344 = vld [vmem:[%s281 + $0x50] sm:$0xff]
        %v345 = vld [vmem:[%s281 + $0x58] sm:$0xff]
        %v346 = vld [vmem:[%s281 + $0x60] sm:$0xff]
        %v347 = vld [vmem:[%s281 + $0x68] sm:$0xff]
        %v348 = vld [vmem:[%s281 + $0x70] sm:$0xff]
        %v349 = vld [vmem:[%s281 + $0x78] sm:$0xff]
        %v350 = vld [vmem:[%s281 + $0x80] sm:$0xff]
        %v351 = vld [vmem:[%s281 + $0x88] sm:$0xff]
        %v352 = vld [vmem:[%s281 + $0x90] sm:$0xff]
        %v353 = vld [vmem:[%s281 + $0x98] sm:$0xff]
        %v354 = vld [vmem:[%s281 + $0xa0] sm:$0xff]
        %v355 = vld [vmem:[%s281 + $0xa8] sm:$0xff]
        %v356 = vld [vmem:[%s281 + $0xb0] sm:$0xff]
        %v357 = vld [vmem:[%s281 + $0xb8] sm:$0xff]
        %v358 = vld [vmem:[%s281 + $0xc0] sm:$0xff]
        %v359 = vld [vmem:[%s281 + $0xc8] sm:$0xff]
        %v360 = vld [vmem:[%s281 + $0xd0] sm:$0xff]
        %v361 = vld [vmem:[%s281 + $0xd8] sm:$0xff]
        %v362 = vld [vmem:[%s281 + $0xe0] sm:$0xff]
        %v363 = vld [vmem:[%s281 + $0xe8] sm:$0xff]
        %v364 = vld [vmem:[%s281 + $0xf0] sm:$0xff]
        %v365 = vld [vmem:[%s281 + $0xf8] sm:$0xff]
        %v366 = vld [vmem:[#allocation5] sm:$0xff]
        %v367 = vld [vmem:[#allocation5 + $0x8] sm:$0xff]
        %v368 = vld [vmem:[#allocation5 + $0x10] sm:$0xff]
        %v369 = vld [vmem:[#allocation5 + $0x18] sm:$0xff]
        %v370 = vld [vmem:[#allocation5 + $0x20] sm:$0xff]
        %v371 = vld [vmem:[#allocation5 + $0x28] sm:$0xff]
        %v372 = vld [vmem:[#allocation5 + $0x30] sm:$0xff]
        %v373 = vld [vmem:[#allocation5 + $0x38] sm:$0xff]
        %v374 = vld [vmem:[#allocation5 + $0x40] sm:$0xff]
        %v375 = vld [vmem:[#allocation5 + $0x48] sm:$0xff]
        %v376 = vld [vmem:[#allocation5 + $0x50] sm:$0xff]
        %v377 = vld [vmem:[#allocation5 + $0x58] sm:$0xff]
        %v378 = vld [vmem:[#allocation5 + $0x60] sm:$0xff]
        %v379 = vld [vmem:[#allocation5 + $0x68] sm:$0xff]
        %v380 = vld [vmem:[#allocation5 + $0x70] sm:$0xff]
        %v381 = vld [vmem:[#allocation5 + $0x78] sm:$0xff]
        %v382 = vld [vmem:[#allocation5 + $0x80] sm:$0xff]
        %v383 = vld [vmem:[#allocation5 + $0x88] sm:$0xff]
        %v384 = vld [vmem:[#allocation5 + $0x90] sm:$0xff]
        %v385 = vld [vmem:[#allocation5 + $0x98] sm:$0xff]
        %v386 = vld [vmem:[#allocation5 + $0xa0] sm:$0xff]
        %v387 = vld [vmem:[#allocation5 + $0xa8] sm:$0xff]
        %v388 = vld [vmem:[#allocation5 + $0xb0] sm:$0xff]
        %v389 = vld [vmem:[#allocation5 + $0xb8] sm:$0xff]
        %v390 = vld [vmem:[#allocation5 + $0xc0] sm:$0xff]
        %v391 = vld [vmem:[#allocation5 + $0xc8] sm:$0xff]
        %v392 = vld [vmem:[#allocation5 + $0xd0] sm:$0xff]
        %v393 = vld [vmem:[#allocation5 + $0xd8] sm:$0xff]
        %v394 = vld [vmem:[#allocation5 + $0xe0] sm:$0xff]
        %v395 = vld [vmem:[#allocation5 + $0xe8] sm:$0xff]
        %v396 = vld [vmem:[#allocation5 + $0xf0] sm:$0xff]
        %v397 = vld [vmem:[#allocation5 + $0xf8] sm:$0xff]
        %v398 = vld [vmem:[#allocation5 + $0x100] sm:$0xff]
        %v399 = vld [vmem:[#allocation5 + $0x108] sm:$0xff]
        %v400 = vld [vmem:[#allocation5 + $0x110] sm:$0xff]
        %v401 = vld [vmem:[#allocation5 + $0x118] sm:$0xff]
        %v402 = vld [vmem:[#allocation5 + $0x120] sm:$0xff]
        %v403 = vld [vmem:[#allocation5 + $0x128] sm:$0xff]
        %v404 = vld [vmem:[#allocation5 + $0x130] sm:$0xff]
        %v405 = vld [vmem:[#allocation5 + $0x138] sm:$0xff]
        %v406 = vld [vmem:[#allocation5 + $0x140] sm:$0xff]
        %v407 = vld [vmem:[#allocation5 + $0x148] sm:$0xff]
        %v408 = vld [vmem:[#allocation5 + $0x150] sm:$0xff]
        %v409 = vld [vmem:[#allocation5 + $0x158] sm:$0xff]
        %v410 = vld [vmem:[#allocation5 + $0x160] sm:$0xff]
        %v411 = vld [vmem:[#allocation5 + $0x168] sm:$0xff]
        %v412 = vld [vmem:[#allocation5 + $0x170] sm:$0xff]
        %v413 = vld [vmem:[#allocation5 + $0x178] sm:$0xff]
        %v414 = vld [vmem:[#allocation5 + $0x180] sm:$0xff]
        %v415 = vld [vmem:[#allocation5 + $0x188] sm:$0xff]
        %v416 = vld [vmem:[#allocation5 + $0x190] sm:$0xff]
        %v417 = vld [vmem:[#allocation5 + $0x198] sm:$0xff]
        %v418 = vld [vmem:[#allocation5 + $0x1a0] sm:$0xff]
        %v419 = vld [vmem:[#allocation5 + $0x1a8] sm:$0xff]
        %v420 = vld [vmem:[#allocation5 + $0x1b0] sm:$0xff]
        %v421 = vld [vmem:[#allocation5 + $0x1b8] sm:$0xff]
        %v422 = vld [vmem:[#allocation5 + $0x1c0] sm:$0xff]
        %v423 = vld [vmem:[#allocation5 + $0x1c8] sm:$0xff]
        %v424 = vld [vmem:[#allocation5 + $0x1d0] sm:$0xff]
        %v425 = vld [vmem:[#allocation5 + $0x1d8] sm:$0xff]
        %v426 = vld [vmem:[#allocation5 + $0x1e0] sm:$0xff]
        %v427 = vld [vmem:[#allocation5 + $0x1e8] sm:$0xff]
        %v428 = vld [vmem:[#allocation5 + $0x1f0] sm:$0xff]
        %v429 = vld [vmem:[#allocation5 + $0x1f8] sm:$0xff]
        %v430 = vld [vmem:[#allocation7] sm:$0xf]
        %v432 = vperm.slane %v430, 0
        %v433 = vperm.slane %v430, 1
        %v434 = vperm.slane %v430, 2
        %v435 = vperm.slane %v430, 3
        %440 = vmatpush.msra.mxu0 %v426
        %441 = vmatpush.msra.mxu0 %v422
        %442 = vmatpush.msra.mxu0 %v418
        %443 = vmatpush.msra.mxu0 %v414
        %444 = vmatpush.msra.mxu0 %v410
        %445 = vmatpush.msra.mxu0 %v406
        %446 = vmatpush.msra.mxu0 %v402
        %447 = vmatpush.msra.mxu0 %v398
        %448 = vmatpush.msra.mxu0 %v394
        %449 = vmatpush.msra.mxu0 %v390
        %450 = vmatpush.msra.mxu0 %v386
        %451 = vmatpush.msra.mxu0 %v382
        %452 = vmatpush.msra.mxu0 %v378
        %453 = vmatpush.msra.mxu0 %v374
        %454 = vmatpush.msra.mxu0 %v370
        %455 = vmatpush.msra.mxu0 %v366
        %456 = vmatmul.f32.gmra.mxu0 %v334
        %v457 = vpop.f32.mrf.mxu0
        %v458 = vadd.f32 %v432, %v457
        %459 = vmatmul.f32.gmra.mxu0 %v335
        %v460 = vpop.f32.mrf.mxu0
        %v461 = vadd.f32 %v432, %v460
        %462 = vmatmul.f32.gmra.mxu0 %v336
        %v463 = vpop.f32.mrf.mxu0
        %v464 = vadd.f32 %v432, %v463
        %465 = vmatmul.f32.gmra.mxu0 %v337
        %v466 = vpop.f32.mrf.mxu0
        %v467 = vadd.f32 %v432, %v466
        %468 = vmatmul.f32.gmra.mxu0 %v338
        %v469 = vpop.f32.mrf.mxu0
        %v470 = vadd.f32 %v432, %v469
        %471 = vmatmul.f32.gmra.mxu0 %v339
        %v472 = vpop.f32.mrf.mxu0
        %v473 = vadd.f32 %v432, %v472
        %474 = vmatmul.f32.gmra.mxu0 %v340
        %v475 = vpop.f32.mrf.mxu0
        %v476 = vadd.f32 %v432, %v475
        %477 = vmatmul.f32.gmra.mxu0 %v341
        %v478 = vpop.f32.mrf.mxu0
        %v479 = vadd.f32 %v432, %v478
        %480 = vmatmul.f32.gmra.mxu0 %v342
        %v481 = vpop.f32.mrf.mxu0
        %v482 = vadd.f32 %v432, %v481
        %483 = vmatmul.f32.gmra.mxu0 %v343
        %v484 = vpop.f32.mrf.mxu0
        %v485 = vadd.f32 %v432, %v484
        %486 = vmatmul.f32.gmra.mxu0 %v344
        %v487 = vpop.f32.mrf.mxu0
        %v488 = vadd.f32 %v432, %v487
        %489 = vmatmul.f32.gmra.mxu0 %v345
        %v490 = vpop.f32.mrf.mxu0
        %v491 = vadd.f32 %v432, %v490
        %492 = vmatmul.f32.gmra.mxu0 %v346
        %v493 = vpop.f32.mrf.mxu0
        %v494 = vadd.f32 %v432, %v493
        %495 = vmatmul.f32.gmra.mxu0 %v347
        %v496 = vpop.f32.mrf.mxu0
        %v497 = vadd.f32 %v432, %v496
        %498 = vmatmul.f32.gmra.mxu0 %v348
        %v499 = vpop.f32.mrf.mxu0
        %v500 = vadd.f32 %v432, %v499
        %501 = vmatmul.f32.gmra.mxu0 %v349
        %v502 = vpop.f32.mrf.mxu0
        %v503 = vadd.f32 %v432, %v502
        %504 = vmatmul.f32.gmra.mxu0 %v350
        %v505 = vpop.f32.mrf.mxu0
        %v506 = vadd.f32 %v432, %v505
        %507 = vmatmul.f32.gmra.mxu0 %v351
        %v508 = vpop.f32.mrf.mxu0
        %v509 = vadd.f32 %v432, %v508
        %510 = vmatmul.f32.gmra.mxu0 %v352
        %v511 = vpop.f32.mrf.mxu0
        %v512 = vadd.f32 %v432, %v511
        %513 = vmatmul.f32.gmra.mxu0 %v353
        %v514 = vpop.f32.mrf.mxu0
        %v515 = vadd.f32 %v432, %v514
        %516 = vmatmul.f32.gmra.mxu0 %v354
        %v517 = vpop.f32.mrf.mxu0
        %v518 = vadd.f32 %v432, %v517
        %519 = vmatmul.f32.gmra.mxu0 %v355
        %v520 = vpop.f32.mrf.mxu0
        %v521 = vadd.f32 %v432, %v520
        %522 = vmatmul.f32.gmra.mxu0 %v356
        %v523 = vpop.f32.mrf.mxu0
        %v524 = vadd.f32 %v432, %v523
        %525 = vmatmul.f32.gmra.mxu0 %v357
        %v526 = vpop.f32.mrf.mxu0
        %v527 = vadd.f32 %v432, %v526
        %528 = vmatmul.f32.gmra.mxu0 %v358
        %v529 = vpop.f32.mrf.mxu0
        %v530 = vadd.f32 %v432, %v529
        %531 = vmatmul.f32.gmra.mxu0 %v359
        %v532 = vpop.f32.mrf.mxu0
        %v533 = vadd.f32 %v432, %v532
        %534 = vmatmul.f32.gmra.mxu0 %v360
        %v535 = vpop.f32.mrf.mxu0
        %v536 = vadd.f32 %v432, %v535
        %537 = vmatmul.f32.gmra.mxu0 %v361
        %v538 = vpop.f32.mrf.mxu0
        %v539 = vadd.f32 %v432, %v538
        %540 = vmatmul.f32.gmra.mxu0 %v362
        %v541 = vpop.f32.mrf.mxu0
        %v542 = vadd.f32 %v432, %v541
        %543 = vmatmul.f32.gmra.mxu0 %v363
        %v544 = vpop.f32.mrf.mxu0
        %v545 = vadd.f32 %v432, %v544
        %546 = vmatmul.f32.gmra.mxu0 %v364
        %v547 = vpop.f32.mrf.mxu0
        %v548 = vadd.f32 %v432, %v547
        %549 = vmatmul.f32.gmra.mxu0 %v365
        %v550 = vpop.f32.mrf.mxu0
        %v551 = vadd.f32 %v432, %v550
        %552 = vdwg.mxu0
        %553 = vmatpush.msra.mxu0 %v427
        %554 = vmatpush.msra.mxu0 %v423
        %555 = vmatpush.msra.mxu0 %v419
        %556 = vmatpush.msra.mxu0 %v415
        %557 = vmatpush.msra.mxu0 %v411
        %558 = vmatpush.msra.mxu0 %v407
        %559 = vmatpush.msra.mxu0 %v403
        %560 = vmatpush.msra.mxu0 %v399
        %561 = vmatpush.msra.mxu0 %v395
        %562 = vmatpush.msra.mxu0 %v391
        %563 = vmatpush.msra.mxu0 %v387
        %564 = vmatpush.msra.mxu0 %v383
        %565 = vmatpush.msra.mxu0 %v379
        %566 = vmatpush.msra.mxu0 %v375
        %567 = vmatpush.msra.mxu0 %v371
        %568 = vmatpush.msra.mxu0 %v367
        %569 = vmatmul.f32.gmra.mxu0 %v334
        %v570 = vpop.f32.mrf.mxu0
        %v571 = vadd.f32 %v433, %v570
        %572 = vmatmul.f32.gmra.mxu0 %v335
        %v573 = vpop.f32.mrf.mxu0
        %v574 = vadd.f32 %v433, %v573
        %575 = vmatmul.f32.gmra.mxu0 %v336
        %v576 = vpop.f32.mrf.mxu0
        %v577 = vadd.f32 %v433, %v576
        %578 = vmatmul.f32.gmra.mxu0 %v337
        %v579 = vpop.f32.mrf.mxu0
        %v580 = vadd.f32 %v433, %v579
        %581 = vmatmul.f32.gmra.mxu0 %v338
        %v582 = vpop.f32.mrf.mxu0
        %v583 = vadd.f32 %v433, %v582
        %584 = vmatmul.f32.gmra.mxu0 %v339
        %v585 = vpop.f32.mrf.mxu0
        %v586 = vadd.f32 %v433, %v585
        %587 = vmatmul.f32.gmra.mxu0 %v340
        %v588 = vpop.f32.mrf.mxu0
        %v589 = vadd.f32 %v433, %v588
        %590 = vmatmul.f32.gmra.mxu0 %v341
        %v591 = vpop.f32.mrf.mxu0
        %v592 = vadd.f32 %v433, %v591
        %593 = vmatmul.f32.gmra.mxu0 %v342
        %v594 = vpop.f32.mrf.mxu0
        %v595 = vadd.f32 %v433, %v594
        %596 = vmatmul.f32.gmra.mxu0 %v343
        %v597 = vpop.f32.mrf.mxu0
        %v598 = vadd.f32 %v433, %v597
        %599 = vmatmul.f32.gmra.mxu0 %v344
        %v600 = vpop.f32.mrf.mxu0
        %v601 = vadd.f32 %v433, %v600
        %602 = vmatmul.f32.gmra.mxu0 %v345
        %v603 = vpop.f32.mrf.mxu0
        %v604 = vadd.f32 %v433, %v603
        %605 = vmatmul.f32.gmra.mxu0 %v346
        %v606 = vpop.f32.mrf.mxu0
        %v607 = vadd.f32 %v433, %v606
        %608 = vmatmul.f32.gmra.mxu0 %v347
        %v609 = vpop.f32.mrf.mxu0
        %v610 = vadd.f32 %v433, %v609
        %611 = vmatmul.f32.gmra.mxu0 %v348
        %v612 = vpop.f32.mrf.mxu0
        %v613 = vadd.f32 %v433, %v612
        %614 = vmatmul.f32.gmra.mxu0 %v349
        %v615 = vpop.f32.mrf.mxu0
        %v616 = vadd.f32 %v433, %v615
        %617 = vmatmul.f32.gmra.mxu0 %v350
        %v618 = vpop.f32.mrf.mxu0
        %v619 = vadd.f32 %v433, %v618
        %620 = vmatmul.f32.gmra.mxu0 %v351
        %v621 = vpop.f32.mrf.mxu0
        %v622 = vadd.f32 %v433, %v621
        %623 = vmatmul.f32.gmra.mxu0 %v352
        %v624 = vpop.f32.mrf.mxu0
        %v625 = vadd.f32 %v433, %v624
        %626 = vmatmul.f32.gmra.mxu0 %v353
        %v627 = vpop.f32.mrf.mxu0
        %v628 = vadd.f32 %v433, %v627
        %629 = vmatmul.f32.gmra.mxu0 %v354
        %v630 = vpop.f32.mrf.mxu0
        %v631 = vadd.f32 %v433, %v630
        %632 = vmatmul.f32.gmra.mxu0 %v355
        %v633 = vpop.f32.mrf.mxu0
        %v634 = vadd.f32 %v433, %v633
        %635 = vmatmul.f32.gmra.mxu0 %v356
        %v636 = vpop.f32.mrf.mxu0
        %v637 = vadd.f32 %v433, %v636
        %638 = vmatmul.f32.gmra.mxu0 %v357
        %v639 = vpop.f32.mrf.mxu0
        %v640 = vadd.f32 %v433, %v639
        %641 = vmatmul.f32.gmra.mxu0 %v358
        %v642 = vpop.f32.mrf.mxu0
        %v643 = vadd.f32 %v433, %v642
        %644 = vmatmul.f32.gmra.mxu0 %v359
        %v645 = vpop.f32.mrf.mxu0
        %v646 = vadd.f32 %v433, %v645
        %647 = vmatmul.f32.gmra.mxu0 %v360
        %v648 = vpop.f32.mrf.mxu0
        %v649 = vadd.f32 %v433, %v648
        %650 = vmatmul.f32.gmra.mxu0 %v361
        %v651 = vpop.f32.mrf.mxu0
        %v652 = vadd.f32 %v433, %v651
        %653 = vmatmul.f32.gmra.mxu0 %v362
        %v654 = vpop.f32.mrf.mxu0
        %v655 = vadd.f32 %v433, %v654
        %656 = vmatmul.f32.gmra.mxu0 %v363
        %v657 = vpop.f32.mrf.mxu0
        %v658 = vadd.f32 %v433, %v657
        %659 = vmatmul.f32.gmra.mxu0 %v364
        %v660 = vpop.f32.mrf.mxu0
        %v661 = vadd.f32 %v433, %v660
        %662 = vmatmul.f32.gmra.mxu0 %v365
        %v663 = vpop.f32.mrf.mxu0
        %v664 = vadd.f32 %v433, %v663
        %665 = vdwg.mxu0
        %666 = vmatpush.msra.mxu0 %v428
        %667 = vmatpush.msra.mxu0 %v424
        %668 = vmatpush.msra.mxu0 %v420
        %669 = vmatpush.msra.mxu0 %v416
        %670 = vmatpush.msra.mxu0 %v412
        %671 = vmatpush.msra.mxu0 %v408
        %672 = vmatpush.msra.mxu0 %v404
        %673 = vmatpush.msra.mxu0 %v400
        %674 = vmatpush.msra.mxu0 %v396
        %675 = vmatpush.msra.mxu0 %v392
        %676 = vmatpush.msra.mxu0 %v388
        %677 = vmatpush.msra.mxu0 %v384
        %678 = vmatpush.msra.mxu0 %v380
        %679 = vmatpush.msra.mxu0 %v376
        %680 = vmatpush.msra.mxu0 %v372
        %681 = vmatpush.msra.mxu0 %v368
        %682 = vmatmul.f32.gmra.mxu0 %v334
        %v683 = vpop.f32.mrf.mxu0
        %v684 = vadd.f32 %v434, %v683
        %685 = vmatmul.f32.gmra.mxu0 %v335
        %v686 = vpop.f32.mrf.mxu0
        %v687 = vadd.f32 %v434, %v686
        %688 = vmatmul.f32.gmra.mxu0 %v336
        %v689 = vpop.f32.mrf.mxu0
        %v690 = vadd.f32 %v434, %v689
        %691 = vmatmul.f32.gmra.mxu0 %v337
        %v692 = vpop.f32.mrf.mxu0
        %v693 = vadd.f32 %v434, %v692
        %694 = vmatmul.f32.gmra.mxu0 %v338
        %v695 = vpop.f32.mrf.mxu0
        %v696 = vadd.f32 %v434, %v695
        %697 = vmatmul.f32.gmra.mxu0 %v339
        %v698 = vpop.f32.mrf.mxu0
        %v699 = vadd.f32 %v434, %v698
        %700 = vmatmul.f32.gmra.mxu0 %v340
        %v701 = vpop.f32.mrf.mxu0
        %v702 = vadd.f32 %v434, %v701
        %703 = vmatmul.f32.gmra.mxu0 %v341
        %v704 = vpop.f32.mrf.mxu0
        %v705 = vadd.f32 %v434, %v704
        %706 = vmatmul.f32.gmra.mxu0 %v342
        %v707 = vpop.f32.mrf.mxu0
        %v708 = vadd.f32 %v434, %v707
        %709 = vmatmul.f32.gmra.mxu0 %v343
        %v710 = vpop.f32.mrf.mxu0
        %v711 = vadd.f32 %v434, %v710
        %712 = vmatmul.f32.gmra.mxu0 %v344
        %v713 = vpop.f32.mrf.mxu0
        %v714 = vadd.f32 %v434, %v713
        %715 = vmatmul.f32.gmra.mxu0 %v345
        %v716 = vpop.f32.mrf.mxu0
        %v717 = vadd.f32 %v434, %v716
        %718 = vmatmul.f32.gmra.mxu0 %v346
        %v719 = vpop.f32.mrf.mxu0
        %v720 = vadd.f32 %v434, %v719
        %721 = vmatmul.f32.gmra.mxu0 %v347
        %v722 = vpop.f32.mrf.mxu0
        %v723 = vadd.f32 %v434, %v722
        %724 = vmatmul.f32.gmra.mxu0 %v348
        %v725 = vpop.f32.mrf.mxu0
        %v726 = vadd.f32 %v434, %v725
        %727 = vmatmul.f32.gmra.mxu0 %v349
        %v728 = vpop.f32.mrf.mxu0
        %v729 = vadd.f32 %v434, %v728
        %730 = vmatmul.f32.gmra.mxu0 %v350
        %v731 = vpop.f32.mrf.mxu0
        %v732 = vadd.f32 %v434, %v731
        %733 = vmatmul.f32.gmra.mxu0 %v351
        %v734 = vpop.f32.mrf.mxu0
        %v735 = vadd.f32 %v434, %v734
        %736 = vmatmul.f32.gmra.mxu0 %v352
        %v737 = vpop.f32.mrf.mxu0
        %v738 = vadd.f32 %v434, %v737
        %739 = vmatmul.f32.gmra.mxu0 %v353
        %v740 = vpop.f32.mrf.mxu0
        %v741 = vadd.f32 %v434, %v740
        %742 = vmatmul.f32.gmra.mxu0 %v354
        %v743 = vpop.f32.mrf.mxu0
        %v744 = vadd.f32 %v434, %v743
        %745 = vmatmul.f32.gmra.mxu0 %v355
        %v746 = vpop.f32.mrf.mxu0
        %v747 = vadd.f32 %v434, %v746
        %748 = vmatmul.f32.gmra.mxu0 %v356
        %v749 = vpop.f32.mrf.mxu0
        %v750 = vadd.f32 %v434, %v749
        %751 = vmatmul.f32.gmra.mxu0 %v357
        %v752 = vpop.f32.mrf.mxu0
        %v753 = vadd.f32 %v434, %v752
        %754 = vmatmul.f32.gmra.mxu0 %v358
        %v755 = vpop.f32.mrf.mxu0
        %v756 = vadd.f32 %v434, %v755
        %757 = vmatmul.f32.gmra.mxu0 %v359
        %v758 = vpop.f32.mrf.mxu0
        %v759 = vadd.f32 %v434, %v758
        %760 = vmatmul.f32.gmra.mxu0 %v360
        %v761 = vpop.f32.mrf.mxu0
        %v762 = vadd.f32 %v434, %v761
        %763 = vmatmul.f32.gmra.mxu0 %v361
        %v764 = vpop.f32.mrf.mxu0
        %v765 = vadd.f32 %v434, %v764
        %766 = vmatmul.f32.gmra.mxu0 %v362
        %v767 = vpop.f32.mrf.mxu0
        %v768 = vadd.f32 %v434, %v767
        %769 = vmatmul.f32.gmra.mxu0 %v363
        %v770 = vpop.f32.mrf.mxu0
        %v771 = vadd.f32 %v434, %v770
        %772 = vmatmul.f32.gmra.mxu0 %v364
        %v773 = vpop.f32.mrf.mxu0
        %v774 = vadd.f32 %v434, %v773
        %775 = vmatmul.f32.gmra.mxu0 %v365
        %v776 = vpop.f32.mrf.mxu0
        %v777 = vadd.f32 %v434, %v776
        %778 = vdwg.mxu0
        %779 = vmatpush.msra.mxu0 %v429
        %780 = vmatpush.msra.mxu0 %v425
        %781 = vmatpush.msra.mxu0 %v421
        %782 = vmatpush.msra.mxu0 %v417
        %783 = vmatpush.msra.mxu0 %v413
        %784 = vmatpush.msra.mxu0 %v409
        %785 = vmatpush.msra.mxu0 %v405
        %786 = vmatpush.msra.mxu0 %v401
        %787 = vmatpush.msra.mxu0 %v397
        %788 = vmatpush.msra.mxu0 %v393
        %789 = vmatpush.msra.mxu0 %v389
        %790 = vmatpush.msra.mxu0 %v385
        %791 = vmatpush.msra.mxu0 %v381
        %792 = vmatpush.msra.mxu0 %v377
        %793 = vmatpush.msra.mxu0 %v373
        %794 = vmatpush.msra.mxu0 %v369
        %795 = vmatmul.f32.gmra.mxu0 %v334
        %v796 = vpop.f32.mrf.mxu0
        %v797 = vadd.f32 %v435, %v796
        %798 = vmatmul.f32.gmra.mxu0 %v335
        %v799 = vpop.f32.mrf.mxu0
        %v800 = vadd.f32 %v435, %v799
        %801 = vmatmul.f32.gmra.mxu0 %v336
        %v802 = vpop.f32.mrf.mxu0
        %v803 = vadd.f32 %v435, %v802
        %804 = vmatmul.f32.gmra.mxu0 %v337
        %v805 = vpop.f32.mrf.mxu0
        %v806 = vadd.f32 %v435, %v805
        %807 = vmatmul.f32.gmra.mxu0 %v338
        %v808 = vpop.f32.mrf.mxu0
        %v809 = vadd.f32 %v435, %v808
        %810 = vmatmul.f32.gmra.mxu0 %v339
        %v811 = vpop.f32.mrf.mxu0
        %v812 = vadd.f32 %v435, %v811
        %813 = vmatmul.f32.gmra.mxu0 %v340
        %v814 = vpop.f32.mrf.mxu0
        %v815 = vadd.f32 %v435, %v814
        %816 = vmatmul.f32.gmra.mxu0 %v341
        %v817 = vpop.f32.mrf.mxu0
        %v818 = vadd.f32 %v435, %v817
        %819 = vmatmul.f32.gmra.mxu0 %v342
        %v820 = vpop.f32.mrf.mxu0
        %v821 = vadd.f32 %v435, %v820
        %822 = vmatmul.f32.gmra.mxu0 %v343
        %v823 = vpop.f32.mrf.mxu0
        %v824 = vadd.f32 %v435, %v823
        %825 = vmatmul.f32.gmra.mxu0 %v344
        %v826 = vpop.f32.mrf.mxu0
        %v827 = vadd.f32 %v435, %v826
        %828 = vmatmul.f32.gmra.mxu0 %v345
        %v829 = vpop.f32.mrf.mxu0
        %v830 = vadd.f32 %v435, %v829
        %831 = vmatmul.f32.gmra.mxu0 %v346
        %v832 = vpop.f32.mrf.mxu0
        %v833 = vadd.f32 %v435, %v832
        %834 = vmatmul.f32.gmra.mxu0 %v347
        %v835 = vpop.f32.mrf.mxu0
        %v836 = vadd.f32 %v435, %v835
        %837 = vmatmul.f32.gmra.mxu0 %v348
        %v838 = vpop.f32.mrf.mxu0
        %v839 = vadd.f32 %v435, %v838
        %840 = vmatmul.f32.gmra.mxu0 %v349
        %v841 = vpop.f32.mrf.mxu0
        %v842 = vadd.f32 %v435, %v841
        %843 = vmatmul.f32.gmra.mxu0 %v350
        %v844 = vpop.f32.mrf.mxu0
        %v845 = vadd.f32 %v435, %v844
        %846 = vmatmul.f32.gmra.mxu0 %v351
        %v847 = vpop.f32.mrf.mxu0
        %v848 = vadd.f32 %v435, %v847
        %849 = vmatmul.f32.gmra.mxu0 %v352
        %v850 = vpop.f32.mrf.mxu0
        %v851 = vadd.f32 %v435, %v850
        %852 = vmatmul.f32.gmra.mxu0 %v353
        %v853 = vpop.f32.mrf.mxu0
        %v854 = vadd.f32 %v435, %v853
        %855 = vmatmul.f32.gmra.mxu0 %v354
        %v856 = vpop.f32.mrf.mxu0
        %v857 = vadd.f32 %v435, %v856
        %858 = vmatmul.f32.gmra.mxu0 %v355
        %v859 = vpop.f32.mrf.mxu0
        %v860 = vadd.f32 %v435, %v859
        %861 = vmatmul.f32.gmra.mxu0 %v356
        %v862 = vpop.f32.mrf.mxu0
        %v863 = vadd.f32 %v435, %v862
        %864 = vmatmul.f32.gmra.mxu0 %v357
        %v865 = vpop.f32.mrf.mxu0
        %v866 = vadd.f32 %v435, %v865
        %867 = vmatmul.f32.gmra.mxu0 %v358
        %v868 = vpop.f32.mrf.mxu0
        %v869 = vadd.f32 %v435, %v868
        %870 = vmatmul.f32.gmra.mxu0 %v359
        %v871 = vpop.f32.mrf.mxu0
        %v872 = vadd.f32 %v435, %v871
        %873 = vmatmul.f32.gmra.mxu0 %v360
        %v874 = vpop.f32.mrf.mxu0
        %v875 = vadd.f32 %v435, %v874
        %876 = vmatmul.f32.gmra.mxu0 %v361
        %v877 = vpop.f32.mrf.mxu0
        %v878 = vadd.f32 %v435, %v877
        %879 = vmatmul.f32.gmra.mxu0 %v362
        %v880 = vpop.f32.mrf.mxu0
        %v881 = vadd.f32 %v435, %v880
        %882 = vmatmul.f32.gmra.mxu0 %v363
        %v883 = vpop.f32.mrf.mxu0
        %v884 = vadd.f32 %v435, %v883
        %885 = vmatmul.f32.gmra.mxu0 %v364
        %v886 = vpop.f32.mrf.mxu0
        %v887 = vadd.f32 %v435, %v886
        %888 = vmatmul.f32.gmra.mxu0 %v365
        %v889 = vpop.f32.mrf.mxu0
        %v890 = vadd.f32 %v435, %v889
        %891 = vdwg.mxu0
        %v892 = vmax.f32 %v458, 0.0
        %v893 = vmax.f32 %v571, 0.0
        %v894 = vmax.f32 %v684, 0.0
        %v895 = vmax.f32 %v797, 0.0
        %v896 = vmax.f32 %v461, 0.0
        %v897 = vmax.f32 %v574, 0.0
        %v898 = vmax.f32 %v687, 0.0
        %v899 = vmax.f32 %v800, 0.0
        %v900 = vmax.f32 %v464, 0.0
        %v901 = vmax.f32 %v577, 0.0
        %v902 = vmax.f32 %v690, 0.0
        %v903 = vmax.f32 %v803, 0.0
        %v904 = vmax.f32 %v467, 0.0
        %v905 = vmax.f32 %v580, 0.0
        %v906 = vmax.f32 %v693, 0.0
        %v907 = vmax.f32 %v806, 0.0
        %v908 = vmax.f32 %v470, 0.0
        %v909 = vmax.f32 %v583, 0.0
        %v910 = vmax.f32 %v696, 0.0
        %v911 = vmax.f32 %v809, 0.0
        %v912 = vmax.f32 %v473, 0.0
        %v913 = vmax.f32 %v586, 0.0
        %v914 = vmax.f32 %v699, 0.0
        %v915 = vmax.f32 %v812, 0.0
        %v916 = vmax.f32 %v476, 0.0
        %v917 = vmax.f32 %v589, 0.0
        %v918 = vmax.f32 %v702, 0.0
        %v919 = vmax.f32 %v815, 0.0
        %v920 = vmax.f32 %v479, 0.0
        %v921 = vmax.f32 %v592, 0.0
        %v922 = vmax.f32 %v705, 0.0
        %v923 = vmax.f32 %v818, 0.0
        %v924 = vmax.f32 %v482, 0.0
        %v925 = vmax.f32 %v595, 0.0
        %v926 = vmax.f32 %v708, 0.0
        %v927 = vmax.f32 %v821, 0.0
        %v928 = vmax.f32 %v485, 0.0
        %v929 = vmax.f32 %v598, 0.0
        %v930 = vmax.f32 %v711, 0.0
        %v931 = vmax.f32 %v824, 0.0
        %v932 = vmax.f32 %v488, 0.0
        %v933 = vmax.f32 %v601, 0.0
        %v934 = vmax.f32 %v714, 0.0
        %v935 = vmax.f32 %v827, 0.0
        %v936 = vmax.f32 %v491, 0.0
        %v937 = vmax.f32 %v604, 0.0
        %v938 = vmax.f32 %v717, 0.0
        %v939 = vmax.f32 %v830, 0.0
        %v940 = vmax.f32 %v494, 0.0
        %v941 = vmax.f32 %v607, 0.0
        %v942 = vmax.f32 %v720, 0.0
        %v943 = vmax.f32 %v833, 0.0
        %v944 = vmax.f32 %v497, 0.0
        %v945 = vmax.f32 %v610, 0.0
        %v946 = vmax.f32 %v723, 0.0
        %v947 = vmax.f32 %v836, 0.0
        %v948 = vmax.f32 %v500, 0.0
        %v949 = vmax.f32 %v613, 0.0
        %v950 = vmax.f32 %v726, 0.0
        %v951 = vmax.f32 %v839, 0.0
        %v952 = vmax.f32 %v503, 0.0
        %v953 = vmax.f32 %v616, 0.0
        %v954 = vmax.f32 %v729, 0.0
        %v955 = vmax.f32 %v842, 0.0
        %v956 = vmax.f32 %v506, 0.0
        %v957 = vmax.f32 %v619, 0.0
        %v958 = vmax.f32 %v732, 0.0
        %v959 = vmax.f32 %v845, 0.0
        %v960 = vmax.f32 %v509, 0.0
        %v961 = vmax.f32 %v622, 0.0
        %v962 = vmax.f32 %v735, 0.0
        %v963 = vmax.f32 %v848, 0.0
        %v964 = vmax.f32 %v512, 0.0
        %v965 = vmax.f32 %v625, 0.0
        %v966 = vmax.f32 %v738, 0.0
        %v967 = vmax.f32 %v851, 0.0
        %v968 = vmax.f32 %v515, 0.0
        %v969 = vmax.f32 %v628, 0.0
        %v970 = vmax.f32 %v741, 0.0
        %v971 = vmax.f32 %v854, 0.0
        %v972 = vmax.f32 %v518, 0.0
        %v973 = vmax.f32 %v631, 0.0
        %v974 = vmax.f32 %v744, 0.0
        %v975 = vmax.f32 %v857, 0.0
        %v976 = vmax.f32 %v521, 0.0
        %v977 = vmax.f32 %v634, 0.0
        %v978 = vmax.f32 %v747, 0.0
        %v979 = vmax.f32 %v860, 0.0
        %v980 = vmax.f32 %v524, 0.0
        %v981 = vmax.f32 %v637, 0.0
        %v982 = vmax.f32 %v750, 0.0
        %v983 = vmax.f32 %v863, 0.0
        %v984 = vmax.f32 %v527, 0.0
        %v985 = vmax.f32 %v640, 0.0
        %v986 = vmax.f32 %v753, 0.0
        %v987 = vmax.f32 %v866, 0.0
        %v988 = vmax.f32 %v530, 0.0
        %v989 = vmax.f32 %v643, 0.0
        %v990 = vmax.f32 %v756, 0.0
        %v991 = vmax.f32 %v869, 0.0
        %v992 = vmax.f32 %v533, 0.0
        %v993 = vmax.f32 %v646, 0.0
        %v994 = vmax.f32 %v759, 0.0
        %v995 = vmax.f32 %v872, 0.0
        %v996 = vmax.f32 %v536, 0.0
        %v997 = vmax.f32 %v649, 0.0
        %v998 = vmax.f32 %v762, 0.0
        %v999 = vmax.f32 %v875, 0.0
        %v1000 = vmax.f32 %v539, 0.0
        %v1001 = vmax.f32 %v652, 0.0
        %v1002 = vmax.f32 %v765, 0.0
        %v1003 = vmax.f32 %v878, 0.0
        %v1004 = vmax.f32 %v542, 0.0
        %v1005 = vmax.f32 %v655, 0.0
        %v1006 = vmax.f32 %v768, 0.0
        %v1007 = vmax.f32 %v881, 0.0
        %v1008 = vmax.f32 %v545, 0.0
        %v1009 = vmax.f32 %v658, 0.0
        %v1010 = vmax.f32 %v771, 0.0
        %v1011 = vmax.f32 %v884, 0.0
        %v1012 = vmax.f32 %v548, 0.0
        %v1013 = vmax.f32 %v661, 0.0
        %v1014 = vmax.f32 %v774, 0.0
        %v1015 = vmax.f32 %v887, 0.0
        %v1016 = vmax.f32 %v551, 0.0
        %v1017 = vmax.f32 %v664, 0.0
        %v1018 = vmax.f32 %v777, 0.0
        %v1019 = vmax.f32 %v890, 0.0
        %1020 = vst [vmem:[%s330] sm:$0xff] %v892
        %1021 = vst [vmem:[%s330 + $0x8] sm:$0xff] %v893
        %1022 = vst [vmem:[%s330 + $0x10] sm:$0xff] %v894
        %1023 = vst [vmem:[%s330 + $0x18] sm:$0xff] %v895
        %1024 = vst [vmem:[%s330 + $0x20] sm:$0xff] %v896
        %1025 = vst [vmem:[%s330 + $0x28] sm:$0xff] %v897
        %1026 = vst [vmem:[%s330 + $0x30] sm:$0xff] %v898
        %1027 = vst [vmem:[%s330 + $0x38] sm:$0xff] %v899
        %1028 = vst [vmem:[%s330 + $0x40] sm:$0xff] %v900
        %1029 = vst [vmem:[%s330 + $0x48] sm:$0xff] %v901
        %1030 = vst [vmem:[%s330 + $0x50] sm:$0xff] %v902
        %1031 = vst [vmem:[%s330 + $0x58] sm:$0xff] %v903
        %1032 = vst [vmem:[%s330 + $0x60] sm:$0xff] %v904
        %1033 = vst [vmem:[%s330 + $0x68] sm:$0xff] %v905
        %1034 = vst [vmem:[%s330 + $0x70] sm:$0xff] %v906
        %1035 = vst [vmem:[%s330 + $0x78] sm:$0xff] %v907
        %1036 = vst [vmem:[%s330 + $0x80] sm:$0xff] %v908
        %1037 = vst [vmem:[%s330 + $0x88] sm:$0xff] %v909
        %1038 = vst [vmem:[%s330 + $0x90] sm:$0xff] %v910
        %1039 = vst [vmem:[%s330 + $0x98] sm:$0xff] %v911
        %1040 = vst [vmem:[%s330 + $0xa0] sm:$0xff] %v912
        %1041 = vst [vmem:[%s330 + $0xa8] sm:$0xff] %v913
        %1042 = vst [vmem:[%s330 + $0xb0] sm:$0xff] %v914
        %1043 = vst [vmem:[%s330 + $0xb8] sm:$0xff] %v915
        %1044 = vst [vmem:[%s330 + $0xc0] sm:$0xff] %v916
        %1045 = vst [vmem:[%s330 + $0xc8] sm:$0xff] %v917
        %1046 = vst [vmem:[%s330 + $0xd0] sm:$0xff] %v918
        %1047 = vst [vmem:[%s330 + $0xd8] sm:$0xff] %v919
        %1048 = vst [vmem:[%s330 + $0xe0] sm:$0xff] %v920
        %1049 = vst [vmem:[%s330 + $0xe8] sm:$0xff] %v921
        %1050 = vst [vmem:[%s330 + $0xf0] sm:$0xff] %v922
        %1051 = vst [vmem:[%s330 + $0xf8] sm:$0xff] %v923
        %1052 = vst [vmem:[%s330 + $0x100] sm:$0xff] %v924
        %1053 = vst [vmem:[%s330 + $0x108] sm:$0xff] %v925
        %1054 = vst [vmem:[%s330 + $0x110] sm:$0xff] %v926
        %1055 = vst [vmem:[%s330 + $0x118] sm:$0xff] %v927
        %1056 = vst [vmem:[%s330 + $0x120] sm:$0xff] %v928
        %1057 = vst [vmem:[%s330 + $0x128] sm:$0xff] %v929
        %1058 = vst [vmem:[%s330 + $0x130] sm:$0xff] %v930
        %1059 = vst [vmem:[%s330 + $0x138] sm:$0xff] %v931
        %1060 = vst [vmem:[%s330 + $0x140] sm:$0xff] %v932
        %1061 = vst [vmem:[%s330 + $0x148] sm:$0xff] %v933
        %1062 = vst [vmem:[%s330 + $0x150] sm:$0xff] %v934
        %1063 = vst [vmem:[%s330 + $0x158] sm:$0xff] %v935
        %1064 = vst [vmem:[%s330 + $0x160] sm:$0xff] %v936
        %1065 = vst [vmem:[%s330 + $0x168] sm:$0xff] %v937
        %1066 = vst [vmem:[%s330 + $0x170] sm:$0xff] %v938
        %1067 = vst [vmem:[%s330 + $0x178] sm:$0xff] %v939
        %1068 = vst [vmem:[%s330 + $0x180] sm:$0xff] %v940
        %1069 = vst [vmem:[%s330 + $0x188] sm:$0xff] %v941
        %1070 = vst [vmem:[%s330 + $0x190] sm:$0xff] %v942
        %1071 = vst [vmem:[%s330 + $0x198] sm:$0xff] %v943
        %1072 = vst [vmem:[%s330 + $0x1a0] sm:$0xff] %v944
        %1073 = vst [vmem:[%s330 + $0x1a8] sm:$0xff] %v945
        %1074 = vst [vmem:[%s330 + $0x1b0] sm:$0xff] %v946
        %1075 = vst [vmem:[%s330 + $0x1b8] sm:$0xff] %v947
        %1076 = vst [vmem:[%s330 + $0x1c0] sm:$0xff] %v948
        %1077 = vst [vmem:[%s330 + $0x1c8] sm:$0xff] %v949
        %1078 = vst [vmem:[%s330 + $0x1d0] sm:$0xff] %v950
        %1079 = vst [vmem:[%s330 + $0x1d8] sm:$0xff] %v951
        %1080 = vst [vmem:[%s330 + $0x1e0] sm:$0xff] %v952
        %1081 = vst [vmem:[%s330 + $0x1e8] sm:$0xff] %v953
        %1082 = vst [vmem:[%s330 + $0x1f0] sm:$0xff] %v954
        %1083 = vst [vmem:[%s330 + $0x1f8] sm:$0xff] %v955
        %1084 = vst [vmem:[%s330 + $0x200] sm:$0xff] %v956
        %1085 = vst [vmem:[%s330 + $0x208] sm:$0xff] %v957
        %1086 = vst [vmem:[%s330 + $0x210] sm:$0xff] %v958
        %1087 = vst [vmem:[%s330 + $0x218] sm:$0xff] %v959
        %1088 = vst [vmem:[%s330 + $0x220] sm:$0xff] %v960
        %1089 = vst [vmem:[%s330 + $0x228] sm:$0xff] %v961
        %1090 = vst [vmem:[%s330 + $0x230] sm:$0xff] %v962
        %1091 = vst [vmem:[%s330 + $0x238] sm:$0xff] %v963
        %1092 = vst [vmem:[%s330 + $0x240] sm:$0xff] %v964
        %1093 = vst [vmem:[%s330 + $0x248] sm:$0xff] %v965
        %1094 = vst [vmem:[%s330 + $0x250] sm:$0xff] %v966
        %1095 = vst [vmem:[%s330 + $0x258] sm:$0xff] %v967
        %1096 = vst [vmem:[%s330 + $0x260] sm:$0xff] %v968
        %1097 = vst [vmem:[%s330 + $0x268] sm:$0xff] %v969
        %1098 = vst [vmem:[%s330 + $0x270] sm:$0xff] %v970
        %1099 = vst [vmem:[%s330 + $0x278] sm:$0xff] %v971
        %1100 = vst [vmem:[%s330 + $0x280] sm:$0xff] %v972
        %1101 = vst [vmem:[%s330 + $0x288] sm:$0xff] %v973
        %1102 = vst [vmem:[%s330 + $0x290] sm:$0xff] %v974
        %1103 = vst [vmem:[%s330 + $0x298] sm:$0xff] %v975
        %1104 = vst [vmem:[%s330 + $0x2a0] sm:$0xff] %v976
        %1105 = vst [vmem:[%s330 + $0x2a8] sm:$0xff] %v977
        %1106 = vst [vmem:[%s330 + $0x2b0] sm:$0xff] %v978
        %1107 = vst [vmem:[%s330 + $0x2b8] sm:$0xff] %v979
        %1108 = vst [vmem:[%s330 + $0x2c0] sm:$0xff] %v980
        %1109 = vst [vmem:[%s330 + $0x2c8] sm:$0xff] %v981
        %1110 = vst [vmem:[%s330 + $0x2d0] sm:$0xff] %v982
        %1111 = vst [vmem:[%s330 + $0x2d8] sm:$0xff] %v983
        %1112 = vst [vmem:[%s330 + $0x2e0] sm:$0xff] %v984
        %1113 = vst [vmem:[%s330 + $0x2e8] sm:$0xff] %v985
        %1114 = vst [vmem:[%s330 + $0x2f0] sm:$0xff] %v986
        %1115 = vst [vmem:[%s330 + $0x2f8] sm:$0xff] %v987
        %1116 = vst [vmem:[%s330 + $0x300] sm:$0xff] %v988
        %1117 = vst [vmem:[%s330 + $0x308] sm:$0xff] %v989
        %1118 = vst [vmem:[%s330 + $0x310] sm:$0xff] %v990
        %1119 = vst [vmem:[%s330 + $0x318] sm:$0xff] %v991
        %1120 = vst [vmem:[%s330 + $0x320] sm:$0xff] %v992
        %1121 = vst [vmem:[%s330 + $0x328] sm:$0xff] %v993
        %1122 = vst [vmem:[%s330 + $0x330] sm:$0xff] %v994
        %1123 = vst [vmem:[%s330 + $0x338] sm:$0xff] %v995
        %1124 = vst [vmem:[%s330 + $0x340] sm:$0xff] %v996
        %1125 = vst [vmem:[%s330 + $0x348] sm:$0xff] %v997
        %1126 = vst [vmem:[%s330 + $0x350] sm:$0xff] %v998
        %1127 = vst [vmem:[%s330 + $0x358] sm:$0xff] %v999
        %1128 = vst [vmem:[%s330 + $0x360] sm:$0xff] %v1000
        %1129 = vst [vmem:[%s330 + $0x368] sm:$0xff] %v1001
        %1130 = vst [vmem:[%s330 + $0x370] sm:$0xff] %v1002
        %1131 = vst [vmem:[%s330 + $0x378] sm:$0xff] %v1003
        %1132 = vst [vmem:[%s330 + $0x380] sm:$0xff] %v1004
        %1133 = vst [vmem:[%s330 + $0x388] sm:$0xff] %v1005
        %1134 = vst [vmem:[%s330 + $0x390] sm:$0xff] %v1006
        %1135 = vst [vmem:[%s330 + $0x398] sm:$0xff] %v1007
        %1136 = vst [vmem:[%s330 + $0x3a0] sm:$0xff] %v1008
        %1137 = vst [vmem:[%s330 + $0x3a8] sm:$0xff] %v1009
        %1138 = vst [vmem:[%s330 + $0x3b0] sm:$0xff] %v1010
        %1139 = vst [vmem:[%s330 + $0x3b8] sm:$0xff] %v1011
        %1140 = vst [vmem:[%s330 + $0x3c0] sm:$0xff] %v1012
        %1141 = vst [vmem:[%s330 + $0x3c8] sm:$0xff] %v1013
        %1142 = vst [vmem:[%s330 + $0x3d0] sm:$0xff] %v1014
        %1143 = vst [vmem:[%s330 + $0x3d8] sm:$0xff] %v1015
        %1144 = vst [vmem:[%s330 + $0x3e0] sm:$0xff] %v1016
        %1145 = vst [vmem:[%s330 + $0x3e8] sm:$0xff] %v1017
        %1146 = vst [vmem:[%s330 + $0x3f0] sm:$0xff] %v1018
        %1147 = vst [vmem:[%s330 + $0x3f8] sm:$0xff] %v1019
        %v1148 = vld [vmem:[#allocation8] sm:$0xff]
        %v1149 = vld [vmem:[#allocation8 + $0x8] sm:$0xff]
        %v1150 = vld [vmem:[#allocation8 + $0x10] sm:$0xff]
        %v1151 = vld [vmem:[#allocation8 + $0x18] sm:$0xff]
        %v1152 = vld [vmem:[#allocation8 + $0x20] sm:$0xff]
        %v1153 = vld [vmem:[#allocation8 + $0x28] sm:$0xff]
        %v1154 = vld [vmem:[#allocation8 + $0x30] sm:$0xff]
        %v1155 = vld [vmem:[#allocation8 + $0x38] sm:$0xff]
        %v1156 = vld [vmem:[#allocation8 + $0x40] sm:$0xff]
        %v1157 = vld [vmem:[#allocation8 + $0x48] sm:$0xff]
        %v1158 = vld [vmem:[#allocation8 + $0x50] sm:$0xff]
        %v1159 = vld [vmem:[#allocation8 + $0x58] sm:$0xff]
        %v1160 = vld [vmem:[#allocation8 + $0x60] sm:$0xff]
        %v1161 = vld [vmem:[#allocation8 + $0x68] sm:$0xff]
        %v1162 = vld [vmem:[#allocation8 + $0x70] sm:$0xff]
        %v1163 = vld [vmem:[#allocation8 + $0x78] sm:$0xff]
        %v1164 = vld [vmem:[#allocation8 + $0x80] sm:$0xff]
        %v1165 = vld [vmem:[#allocation8 + $0x88] sm:$0xff]
        %v1166 = vld [vmem:[#allocation8 + $0x90] sm:$0xff]
        %v1167 = vld [vmem:[#allocation8 + $0x98] sm:$0xff]
        %v1168 = vld [vmem:[#allocation8 + $0xa0] sm:$0xff]
        %v1169 = vld [vmem:[#allocation8 + $0xa8] sm:$0xff]
        %v1170 = vld [vmem:[#allocation8 + $0xb0] sm:$0xff]
        %v1171 = vld [vmem:[#allocation8 + $0xb8] sm:$0xff]
        %v1172 = vld [vmem:[#allocation8 + $0xc0] sm:$0xff]
        %v1173 = vld [vmem:[#allocation8 + $0xc8] sm:$0xff]
        %v1174 = vld [vmem:[#allocation8 + $0xd0] sm:$0xff]
        %v1175 = vld [vmem:[#allocation8 + $0xd8] sm:$0xff]
        %v1176 = vld [vmem:[#allocation8 + $0xe0] sm:$0xff]
        %v1177 = vld [vmem:[#allocation8 + $0xe8] sm:$0xff]
        %v1178 = vld [vmem:[#allocation8 + $0xf0] sm:$0xff]
        %v1179 = vld [vmem:[#allocation8 + $0xf8] sm:$0xff]
        %v1180 = vld [vmem:[#allocation8 + $0x100] sm:$0xff]
        %v1181 = vld [vmem:[#allocation8 + $0x108] sm:$0xff]
        %v1182 = vld [vmem:[#allocation8 + $0x110] sm:$0xff]
        %v1183 = vld [vmem:[#allocation8 + $0x118] sm:$0xff]
        %v1184 = vld [vmem:[#allocation8 + $0x120] sm:$0xff]
        %v1185 = vld [vmem:[#allocation8 + $0x128] sm:$0xff]
        %v1186 = vld [vmem:[#allocation8 + $0x130] sm:$0xff]
        %v1187 = vld [vmem:[#allocation8 + $0x138] sm:$0xff]
        %v1188 = vld [vmem:[#allocation8 + $0x140] sm:$0xff]
        %v1189 = vld [vmem:[#allocation8 + $0x148] sm:$0xff]
        %v1190 = vld [vmem:[#allocation8 + $0x150] sm:$0xff]
        %v1191 = vld [vmem:[#allocation8 + $0x158] sm:$0xff]
        %v1192 = vld [vmem:[#allocation8 + $0x160] sm:$0xff]
        %v1193 = vld [vmem:[#allocation8 + $0x168] sm:$0xff]
        %v1194 = vld [vmem:[#allocation8 + $0x170] sm:$0xff]
        %v1195 = vld [vmem:[#allocation8 + $0x178] sm:$0xff]
        %v1196 = vld [vmem:[#allocation8 + $0x180] sm:$0xff]
        %v1197 = vld [vmem:[#allocation8 + $0x188] sm:$0xff]
        %v1198 = vld [vmem:[#allocation8 + $0x190] sm:$0xff]
        %v1199 = vld [vmem:[#allocation8 + $0x198] sm:$0xff]
        %v1200 = vld [vmem:[#allocation8 + $0x1a0] sm:$0xff]
        %v1201 = vld [vmem:[#allocation8 + $0x1a8] sm:$0xff]
        %v1202 = vld [vmem:[#allocation8 + $0x1b0] sm:$0xff]
        %v1203 = vld [vmem:[#allocation8 + $0x1b8] sm:$0xff]
        %v1204 = vld [vmem:[#allocation8 + $0x1c0] sm:$0xff]
        %v1205 = vld [vmem:[#allocation8 + $0x1c8] sm:$0xff]
        %v1206 = vld [vmem:[#allocation8 + $0x1d0] sm:$0xff]
        %v1207 = vld [vmem:[#allocation8 + $0x1d8] sm:$0xff]
        %v1208 = vld [vmem:[#allocation8 + $0x1e0] sm:$0xff]
        %v1209 = vld [vmem:[#allocation8 + $0x1e8] sm:$0xff]
        %v1210 = vld [vmem:[#allocation8 + $0x1f0] sm:$0xff]
        %v1211 = vld [vmem:[#allocation8 + $0x1f8] sm:$0xff]
        %v1212 = vld [vmem:[%s4] sm:$0x1]
        %v1214 = vperm.slane %v1212, 0
        %1216 = vmatpush.msra.mxu0 %v1163
        %1217 = vmatpush.msra.mxu0 %v1162
        %1218 = vmatpush.msra.mxu0 %v1161
        %1219 = vmatpush.msra.mxu0 %v1160
        %1220 = vmatpush.msra.mxu0 %v1159
        %1221 = vmatpush.msra.mxu0 %v1158
        %1222 = vmatpush.msra.mxu0 %v1157
        %1223 = vmatpush.msra.mxu0 %v1156
        %1224 = vmatpush.msra.mxu0 %v1155
        %1225 = vmatpush.msra.mxu0 %v1154
        %1226 = vmatpush.msra.mxu0 %v1153
        %1227 = vmatpush.msra.mxu0 %v1152
        %1228 = vmatpush.msra.mxu0 %v1151
        %1229 = vmatpush.msra.mxu0 %v1150
        %1230 = vmatpush.msra.mxu0 %v1149
        %1231 = vmatpush.msra.mxu0 %v1148
        %1232 = vmatmul.f32.gmra.mxu0 %v892
        %v1233 = vpop.f32.mrf.mxu0
        %v1234 = vadd.f32 %v1214, %v1233
        %1235 = vmatmul.f32.gmra.mxu0 %v896
        %v1236 = vpop.f32.mrf.mxu0
        %v1237 = vadd.f32 %v1214, %v1236
        %1238 = vmatmul.f32.gmra.mxu0 %v900
        %v1239 = vpop.f32.mrf.mxu0
        %v1240 = vadd.f32 %v1214, %v1239
        %1241 = vmatmul.f32.gmra.mxu0 %v904
        %v1242 = vpop.f32.mrf.mxu0
        %v1243 = vadd.f32 %v1214, %v1242
        %1244 = vmatmul.f32.gmra.mxu0 %v908
        %v1245 = vpop.f32.mrf.mxu0
        %v1246 = vadd.f32 %v1214, %v1245
        %1247 = vmatmul.f32.gmra.mxu0 %v912
        %v1248 = vpop.f32.mrf.mxu0
        %v1249 = vadd.f32 %v1214, %v1248
        %1250 = vmatmul.f32.gmra.mxu0 %v916
        %v1251 = vpop.f32.mrf.mxu0
        %v1252 = vadd.f32 %v1214, %v1251
        %1253 = vmatmul.f32.gmra.mxu0 %v920
        %v1254 = vpop.f32.mrf.mxu0
        %v1255 = vadd.f32 %v1214, %v1254
        %1256 = vmatmul.f32.gmra.mxu0 %v924
        %v1257 = vpop.f32.mrf.mxu0
        %v1258 = vadd.f32 %v1214, %v1257
        %1259 = vmatmul.f32.gmra.mxu0 %v928
        %v1260 = vpop.f32.mrf.mxu0
        %v1261 = vadd.f32 %v1214, %v1260
        %1262 = vmatmul.f32.gmra.mxu0 %v932
        %v1263 = vpop.f32.mrf.mxu0
        %v1264 = vadd.f32 %v1214, %v1263
        %1265 = vmatmul.f32.gmra.mxu0 %v936
        %v1266 = vpop.f32.mrf.mxu0
        %v1267 = vadd.f32 %v1214, %v1266
        %1268 = vmatmul.f32.gmra.mxu0 %v940
        %v1269 = vpop.f32.mrf.mxu0
        %v1270 = vadd.f32 %v1214, %v1269
        %1271 = vmatmul.f32.gmra.mxu0 %v944
        %v1272 = vpop.f32.mrf.mxu0
        %v1273 = vadd.f32 %v1214, %v1272
        %1274 = vmatmul.f32.gmra.mxu0 %v948
        %v1275 = vpop.f32.mrf.mxu0
        %v1276 = vadd.f32 %v1214, %v1275
        %1277 = vmatmul.f32.gmra.mxu0 %v952
        %v1278 = vpop.f32.mrf.mxu0
        %v1279 = vadd.f32 %v1214, %v1278
        %1280 = vmatmul.f32.gmra.mxu0 %v956
        %v1281 = vpop.f32.mrf.mxu0
        %v1282 = vadd.f32 %v1214, %v1281
        %1283 = vmatmul.f32.gmra.mxu0 %v960
        %v1284 = vpop.f32.mrf.mxu0
        %v1285 = vadd.f32 %v1214, %v1284
        %1286 = vmatmul.f32.gmra.mxu0 %v964
        %v1287 = vpop.f32.mrf.mxu0
        %v1288 = vadd.f32 %v1214, %v1287
        %1289 = vmatmul.f32.gmra.mxu0 %v968
        %v1290 = vpop.f32.mrf.mxu0
        %v1291 = vadd.f32 %v1214, %v1290
        %1292 = vmatmul.f32.gmra.mxu0 %v972
        %v1293 = vpop.f32.mrf.mxu0
        %v1294 = vadd.f32 %v1214, %v1293
        %1295 = vmatmul.f32.gmra.mxu0 %v976
        %v1296 = vpop.f32.mrf.mxu0
        %v1297 = vadd.f32 %v1214, %v1296
        %1298 = vmatmul.f32.gmra.mxu0 %v980
        %v1299 = vpop.f32.mrf.mxu0
        %v1300 = vadd.f32 %v1214, %v1299
        %1301 = vmatmul.f32.gmra.mxu0 %v984
        %v1302 = vpop.f32.mrf.mxu0
        %v1303 = vadd.f32 %v1214, %v1302
        %1304 = vmatmul.f32.gmra.mxu0 %v988
        %v1305 = vpop.f32.mrf.mxu0
        %v1306 = vadd.f32 %v1214, %v1305
        %1307 = vmatmul.f32.gmra.mxu0 %v992
        %v1308 = vpop.f32.mrf.mxu0
        %v1309 = vadd.f32 %v1214, %v1308
        %1310 = vmatmul.f32.gmra.mxu0 %v996
        %v1311 = vpop.f32.mrf.mxu0
        %v1312 = vadd.f32 %v1214, %v1311
        %1313 = vmatmul.f32.gmra.mxu0 %v1000
        %v1314 = vpop.f32.mrf.mxu0
        %v1315 = vadd.f32 %v1214, %v1314
        %1316 = vmatmul.f32.gmra.mxu0 %v1004
        %v1317 = vpop.f32.mrf.mxu0
        %v1318 = vadd.f32 %v1214, %v1317
        %1319 = vmatmul.f32.gmra.mxu0 %v1008
        %v1320 = vpop.f32.mrf.mxu0
        %v1321 = vadd.f32 %v1214, %v1320
        %1322 = vmatmul.f32.gmra.mxu0 %v1012
        %v1323 = vpop.f32.mrf.mxu0
        %v1324 = vadd.f32 %v1214, %v1323
        %1325 = vmatmul.f32.gmra.mxu0 %v1016
        %v1326 = vpop.f32.mrf.mxu0
        %v1327 = vadd.f32 %v1214, %v1326
        %1328 = vdwg.mxu0
        %1329 = vmatpush.msra.mxu0 %v1179
        %1330 = vmatpush.msra.mxu0 %v1178
        %1331 = vmatpush.msra.mxu0 %v1177
        %1332 = vmatpush.msra.mxu0 %v1176
        %1333 = vmatpush.msra.mxu0 %v1175
        %1334 = vmatpush.msra.mxu0 %v1174
        %1335 = vmatpush.msra.mxu0 %v1173
        %1336 = vmatpush.msra.mxu0 %v1172
        %1337 = vmatpush.msra.mxu0 %v1171
        %1338 = vmatpush.msra.mxu0 %v1170
        %1339 = vmatpush.msra.mxu0 %v1169
        %1340 = vmatpush.msra.mxu0 %v1168
        %1341 = vmatpush.msra.mxu0 %v1167
        %1342 = vmatpush.msra.mxu0 %v1166
        %1343 = vmatpush.msra.mxu0 %v1165
        %1344 = vmatpush.msra.mxu0 %v1164
        %1345 = vmatmul.f32.gmra.mxu0 %v893
        %v1346 = vpop.f32.mrf.mxu0
        %v1347 = vadd.f32 %v1234, %v1346
        %1348 = vmatmul.f32.gmra.mxu0 %v897
        %v1349 = vpop.f32.mrf.mxu0
        %v1350 = vadd.f32 %v1237, %v1349
        %1351 = vmatmul.f32.gmra.mxu0 %v901
        %v1352 = vpop.f32.mrf.mxu0
        %v1353 = vadd.f32 %v1240, %v1352
        %1354 = vmatmul.f32.gmra.mxu0 %v905
        %v1355 = vpop.f32.mrf.mxu0
        %v1356 = vadd.f32 %v1243, %v1355
        %1357 = vmatmul.f32.gmra.mxu0 %v909
        %v1358 = vpop.f32.mrf.mxu0
        %v1359 = vadd.f32 %v1246, %v1358
        %1360 = vmatmul.f32.gmra.mxu0 %v913
        %v1361 = vpop.f32.mrf.mxu0
        %v1362 = vadd.f32 %v1249, %v1361
        %1363 = vmatmul.f32.gmra.mxu0 %v917
        %v1364 = vpop.f32.mrf.mxu0
        %v1365 = vadd.f32 %v1252, %v1364
        %1366 = vmatmul.f32.gmra.mxu0 %v921
        %v1367 = vpop.f32.mrf.mxu0
        %v1368 = vadd.f32 %v1255, %v1367
        %1369 = vmatmul.f32.gmra.mxu0 %v925
        %v1370 = vpop.f32.mrf.mxu0
        %v1371 = vadd.f32 %v1258, %v1370
        %1372 = vmatmul.f32.gmra.mxu0 %v929
        %v1373 = vpop.f32.mrf.mxu0
        %v1374 = vadd.f32 %v1261, %v1373
        %1375 = vmatmul.f32.gmra.mxu0 %v933
        %v1376 = vpop.f32.mrf.mxu0
        %v1377 = vadd.f32 %v1264, %v1376
        %1378 = vmatmul.f32.gmra.mxu0 %v937
        %v1379 = vpop.f32.mrf.mxu0
        %v1380 = vadd.f32 %v1267, %v1379
        %1381 = vmatmul.f32.gmra.mxu0 %v941
        %v1382 = vpop.f32.mrf.mxu0
        %v1383 = vadd.f32 %v1270, %v1382
        %1384 = vmatmul.f32.gmra.mxu0 %v945
        %v1385 = vpop.f32.mrf.mxu0
        %v1386 = vadd.f32 %v1273, %v1385
        %1387 = vmatmul.f32.gmra.mxu0 %v949
        %v1388 = vpop.f32.mrf.mxu0
        %v1389 = vadd.f32 %v1276, %v1388
        %1390 = vmatmul.f32.gmra.mxu0 %v953
        %v1391 = vpop.f32.mrf.mxu0
        %v1392 = vadd.f32 %v1279, %v1391
        %1393 = vmatmul.f32.gmra.mxu0 %v957
        %v1394 = vpop.f32.mrf.mxu0
        %v1395 = vadd.f32 %v1282, %v1394
        %1396 = vmatmul.f32.gmra.mxu0 %v961
        %v1397 = vpop.f32.mrf.mxu0
        %v1398 = vadd.f32 %v1285, %v1397
        %1399 = vmatmul.f32.gmra.mxu0 %v965
        %v1400 = vpop.f32.mrf.mxu0
        %v1401 = vadd.f32 %v1288, %v1400
        %1402 = vmatmul.f32.gmra.mxu0 %v969
        %v1403 = vpop.f32.mrf.mxu0
        %v1404 = vadd.f32 %v1291, %v1403
        %1405 = vmatmul.f32.gmra.mxu0 %v973
        %v1406 = vpop.f32.mrf.mxu0
        %v1407 = vadd.f32 %v1294, %v1406
        %1408 = vmatmul.f32.gmra.mxu0 %v977
        %v1409 = vpop.f32.mrf.mxu0
        %v1410 = vadd.f32 %v1297, %v1409
        %1411 = vmatmul.f32.gmra.mxu0 %v981
        %v1412 = vpop.f32.mrf.mxu0
        %v1413 = vadd.f32 %v1300, %v1412
        %1414 = vmatmul.f32.gmra.mxu0 %v985
        %v1415 = vpop.f32.mrf.mxu0
        %v1416 = vadd.f32 %v1303, %v1415
        %1417 = vmatmul.f32.gmra.mxu0 %v989
        %v1418 = vpop.f32.mrf.mxu0
        %v1419 = vadd.f32 %v1306, %v1418
        %1420 = vmatmul.f32.gmra.mxu0 %v993
        %v1421 = vpop.f32.mrf.mxu0
        %v1422 = vadd.f32 %v1309, %v1421
        %1423 = vmatmul.f32.gmra.mxu0 %v997
        %v1424 = vpop.f32.mrf.mxu0
        %v1425 = vadd.f32 %v1312, %v1424
        %1426 = vmatmul.f32.gmra.mxu0 %v1001
        %v1427 = vpop.f32.mrf.mxu0
        %v1428 = vadd.f32 %v1315, %v1427
        %1429 = vmatmul.f32.gmra.mxu0 %v1005
        %v1430 = vpop.f32.mrf.mxu0
        %v1431 = vadd.f32 %v1318, %v1430
        %1432 = vmatmul.f32.gmra.mxu0 %v1009
        %v1433 = vpop.f32.mrf.mxu0
        %v1434 = vadd.f32 %v1321, %v1433
        %1435 = vmatmul.f32.gmra.mxu0 %v1013
        %v1436 = vpop.f32.mrf.mxu0
        %v1437 = vadd.f32 %v1324, %v1436
        %1438 = vmatmul.f32.gmra.mxu0 %v1017
        %v1439 = vpop.f32.mrf.mxu0
        %v1440 = vadd.f32 %v1327, %v1439
        %1441 = vdwg.mxu0
        %1442 = vmatpush.msra.mxu0 %v1195
        %1443 = vmatpush.msra.mxu0 %v1194
        %1444 = vmatpush.msra.mxu0 %v1193
        %1445 = vmatpush.msra.mxu0 %v1192
        %1446 = vmatpush.msra.mxu0 %v1191
        %1447 = vmatpush.msra.mxu0 %v1190
        %1448 = vmatpush.msra.mxu0 %v1189
        %1449 = vmatpush.msra.mxu0 %v1188
        %1450 = vmatpush.msra.mxu0 %v1187
        %1451 = vmatpush.msra.mxu0 %v1186
        %1452 = vmatpush.msra.mxu0 %v1185
        %1453 = vmatpush.msra.mxu0 %v1184
        %1454 = vmatpush.msra.mxu0 %v1183
        %1455 = vmatpush.msra.mxu0 %v1182
        %1456 = vmatpush.msra.mxu0 %v1181
        %1457 = vmatpush.msra.mxu0 %v1180
        %1458 = vmatmul.f32.gmra.mxu0 %v894
        %v1459 = vpop.f32.mrf.mxu0
        %v1460 = vadd.f32 %v1347, %v1459
        %1461 = vmatmul.f32.gmra.mxu0 %v898
        %v1462 = vpop.f32.mrf.mxu0
        %v1463 = vadd.f32 %v1350, %v1462
        %1464 = vmatmul.f32.gmra.mxu0 %v902
        %v1465 = vpop.f32.mrf.mxu0
        %v1466 = vadd.f32 %v1353, %v1465
        %1467 = vmatmul.f32.gmra.mxu0 %v906
        %v1468 = vpop.f32.mrf.mxu0
        %v1469 = vadd.f32 %v1356, %v1468
        %1470 = vmatmul.f32.gmra.mxu0 %v910
        %v1471 = vpop.f32.mrf.mxu0
        %v1472 = vadd.f32 %v1359, %v1471
        %1473 = vmatmul.f32.gmra.mxu0 %v914
        %v1474 = vpop.f32.mrf.mxu0
        %v1475 = vadd.f32 %v1362, %v1474
        %1476 = vmatmul.f32.gmra.mxu0 %v918
        %v1477 = vpop.f32.mrf.mxu0
        %v1478 = vadd.f32 %v1365, %v1477
        %1479 = vmatmul.f32.gmra.mxu0 %v922
        %v1480 = vpop.f32.mrf.mxu0
        %v1481 = vadd.f32 %v1368, %v1480
        %1482 = vmatmul.f32.gmra.mxu0 %v926
        %v1483 = vpop.f32.mrf.mxu0
        %v1484 = vadd.f32 %v1371, %v1483
        %1485 = vmatmul.f32.gmra.mxu0 %v930
        %v1486 = vpop.f32.mrf.mxu0
        %v1487 = vadd.f32 %v1374, %v1486
        %1488 = vmatmul.f32.gmra.mxu0 %v934
        %v1489 = vpop.f32.mrf.mxu0
        %v1490 = vadd.f32 %v1377, %v1489
        %1491 = vmatmul.f32.gmra.mxu0 %v938
        %v1492 = vpop.f32.mrf.mxu0
        %v1493 = vadd.f32 %v1380, %v1492
        %1494 = vmatmul.f32.gmra.mxu0 %v942
        %v1495 = vpop.f32.mrf.mxu0
        %v1496 = vadd.f32 %v1383, %v1495
        %1497 = vmatmul.f32.gmra.mxu0 %v946
        %v1498 = vpop.f32.mrf.mxu0
        %v1499 = vadd.f32 %v1386, %v1498
        %1500 = vmatmul.f32.gmra.mxu0 %v950
        %v1501 = vpop.f32.mrf.mxu0
        %v1502 = vadd.f32 %v1389, %v1501
        %1503 = vmatmul.f32.gmra.mxu0 %v954
        %v1504 = vpop.f32.mrf.mxu0
        %v1505 = vadd.f32 %v1392, %v1504
        %1506 = vmatmul.f32.gmra.mxu0 %v958
        %v1507 = vpop.f32.mrf.mxu0
        %v1508 = vadd.f32 %v1395, %v1507
        %1509 = vmatmul.f32.gmra.mxu0 %v962
        %v1510 = vpop.f32.mrf.mxu0
        %v1511 = vadd.f32 %v1398, %v1510
        %1512 = vmatmul.f32.gmra.mxu0 %v966
        %v1513 = vpop.f32.mrf.mxu0
        %v1514 = vadd.f32 %v1401, %v1513
        %1515 = vmatmul.f32.gmra.mxu0 %v970
        %v1516 = vpop.f32.mrf.mxu0
        %v1517 = vadd.f32 %v1404, %v1516
        %1518 = vmatmul.f32.gmra.mxu0 %v974
        %v1519 = vpop.f32.mrf.mxu0
        %v1520 = vadd.f32 %v1407, %v1519
        %1521 = vmatmul.f32.gmra.mxu0 %v978
        %v1522 = vpop.f32.mrf.mxu0
        %v1523 = vadd.f32 %v1410, %v1522
        %1524 = vmatmul.f32.gmra.mxu0 %v982
        %v1525 = vpop.f32.mrf.mxu0
        %v1526 = vadd.f32 %v1413, %v1525
        %1527 = vmatmul.f32.gmra.mxu0 %v986
        %v1528 = vpop.f32.mrf.mxu0
        %v1529 = vadd.f32 %v1416, %v1528
        %1530 = vmatmul.f32.gmra.mxu0 %v990
        %v1531 = vpop.f32.mrf.mxu0
        %v1532 = vadd.f32 %v1419, %v1531
        %1533 = vmatmul.f32.gmra.mxu0 %v994
        %v1534 = vpop.f32.mrf.mxu0
        %v1535 = vadd.f32 %v1422, %v1534
        %1536 = vmatmul.f32.gmra.mxu0 %v998
        %v1537 = vpop.f32.mrf.mxu0
        %v1538 = vadd.f32 %v1425, %v1537
        %1539 = vmatmul.f32.gmra.mxu0 %v1002
        %v1540 = vpop.f32.mrf.mxu0
        %v1541 = vadd.f32 %v1428, %v1540
        %1542 = vmatmul.f32.gmra.mxu0 %v1006
        %v1543 = vpop.f32.mrf.mxu0
        %v1544 = vadd.f32 %v1431, %v1543
        %1545 = vmatmul.f32.gmra.mxu0 %v1010
        %v1546 = vpop.f32.mrf.mxu0
        %v1547 = vadd.f32 %v1434, %v1546
        %1548 = vmatmul.f32.gmra.mxu0 %v1014
        %v1549 = vpop.f32.mrf.mxu0
        %v1550 = vadd.f32 %v1437, %v1549
        %1551 = vmatmul.f32.gmra.mxu0 %v1018
        %v1552 = vpop.f32.mrf.mxu0
        %v1553 = vadd.f32 %v1440, %v1552
        %1554 = vdwg.mxu0
        %1555 = vmatpush.msra.mxu0 %v1211
        %1556 = vmatpush.msra.mxu0 %v1210
        %1557 = vmatpush.msra.mxu0 %v1209
        %1558 = vmatpush.msra.mxu0 %v1208
        %1559 = vmatpush.msra.mxu0 %v1207
        %1560 = vmatpush.msra.mxu0 %v1206
        %1561 = vmatpush.msra.mxu0 %v1205
        %1562 = vmatpush.msra.mxu0 %v1204
        %1563 = vmatpush.msra.mxu0 %v1203
        %1564 = vmatpush.msra.mxu0 %v1202
        %1565 = vmatpush.msra.mxu0 %v1201
        %1566 = vmatpush.msra.mxu0 %v1200
        %1567 = vmatpush.msra.mxu0 %v1199
        %1568 = vmatpush.msra.mxu0 %v1198
        %1569 = vmatpush.msra.mxu0 %v1197
        %1570 = vmatpush.msra.mxu0 %v1196
        %1571 = vmatmul.f32.gmra.mxu0 %v895
        %v1572 = vpop.f32.mrf.mxu0
        %v1573 = vadd.f32 %v1460, %v1572
        %1574 = vmatmul.f32.gmra.mxu0 %v899
        %v1575 = vpop.f32.mrf.mxu0
        %v1576 = vadd.f32 %v1463, %v1575
        %1577 = vmatmul.f32.gmra.mxu0 %v903
        %v1578 = vpop.f32.mrf.mxu0
        %v1579 = vadd.f32 %v1466, %v1578
        %1580 = vmatmul.f32.gmra.mxu0 %v907
        %v1581 = vpop.f32.mrf.mxu0
        %v1582 = vadd.f32 %v1469, %v1581
        %1583 = vmatmul.f32.gmra.mxu0 %v911
        %v1584 = vpop.f32.mrf.mxu0
        %v1585 = vadd.f32 %v1472, %v1584
        %1586 = vmatmul.f32.gmra.mxu0 %v915
        %v1587 = vpop.f32.mrf.mxu0
        %v1588 = vadd.f32 %v1475, %v1587
        %1589 = vmatmul.f32.gmra.mxu0 %v919
        %v1590 = vpop.f32.mrf.mxu0
        %v1591 = vadd.f32 %v1478, %v1590
        %1592 = vmatmul.f32.gmra.mxu0 %v923
        %v1593 = vpop.f32.mrf.mxu0
        %v1594 = vadd.f32 %v1481, %v1593
        %1595 = vmatmul.f32.gmra.mxu0 %v927
        %v1596 = vpop.f32.mrf.mxu0
        %v1597 = vadd.f32 %v1484, %v1596
        %1598 = vmatmul.f32.gmra.mxu0 %v931
        %v1599 = vpop.f32.mrf.mxu0
        %v1600 = vadd.f32 %v1487, %v1599
        %1601 = vmatmul.f32.gmra.mxu0 %v935
        %v1602 = vpop.f32.mrf.mxu0
        %v1603 = vadd.f32 %v1490, %v1602
        %1604 = vmatmul.f32.gmra.mxu0 %v939
        %v1605 = vpop.f32.mrf.mxu0
        %v1606 = vadd.f32 %v1493, %v1605
        %1607 = vmatmul.f32.gmra.mxu0 %v943
        %v1608 = vpop.f32.mrf.mxu0
        %v1609 = vadd.f32 %v1496, %v1608
        %1610 = vmatmul.f32.gmra.mxu0 %v947
        %v1611 = vpop.f32.mrf.mxu0
        %v1612 = vadd.f32 %v1499, %v1611
        %1613 = vmatmul.f32.gmra.mxu0 %v951
        %v1614 = vpop.f32.mrf.mxu0
        %v1615 = vadd.f32 %v1502, %v1614
        %1616 = vmatmul.f32.gmra.mxu0 %v955
        %v1617 = vpop.f32.mrf.mxu0
        %v1618 = vadd.f32 %v1505, %v1617
        %1619 = vmatmul.f32.gmra.mxu0 %v959
        %v1620 = vpop.f32.mrf.mxu0
        %v1621 = vadd.f32 %v1508, %v1620
        %1622 = vmatmul.f32.gmra.mxu0 %v963
        %v1623 = vpop.f32.mrf.mxu0
        %v1624 = vadd.f32 %v1511, %v1623
        %1625 = vmatmul.f32.gmra.mxu0 %v967
        %v1626 = vpop.f32.mrf.mxu0
        %v1627 = vadd.f32 %v1514, %v1626
        %1628 = vmatmul.f32.gmra.mxu0 %v971
        %v1629 = vpop.f32.mrf.mxu0
        %v1630 = vadd.f32 %v1517, %v1629
        %1631 = vmatmul.f32.gmra.mxu0 %v975
        %v1632 = vpop.f32.mrf.mxu0
        %v1633 = vadd.f32 %v1520, %v1632
        %1634 = vmatmul.f32.gmra.mxu0 %v979
        %v1635 = vpop.f32.mrf.mxu0
        %v1636 = vadd.f32 %v1523, %v1635
        %1637 = vmatmul.f32.gmra.mxu0 %v983
        %v1638 = vpop.f32.mrf.mxu0
        %v1639 = vadd.f32 %v1526, %v1638
        %1640 = vmatmul.f32.gmra.mxu0 %v987
        %v1641 = vpop.f32.mrf.mxu0
        %v1642 = vadd.f32 %v1529, %v1641
        %1643 = vmatmul.f32.gmra.mxu0 %v991
        %v1644 = vpop.f32.mrf.mxu0
        %v1645 = vadd.f32 %v1532, %v1644
        %1646 = vmatmul.f32.gmra.mxu0 %v995
        %v1647 = vpop.f32.mrf.mxu0
        %v1648 = vadd.f32 %v1535, %v1647
        %1649 = vmatmul.f32.gmra.mxu0 %v999
        %v1650 = vpop.f32.mrf.mxu0
        %v1651 = vadd.f32 %v1538, %v1650
        %1652 = vmatmul.f32.gmra.mxu0 %v1003
        %v1653 = vpop.f32.mrf.mxu0
        %v1654 = vadd.f32 %v1541, %v1653
        %1655 = vmatmul.f32.gmra.mxu0 %v1007
        %v1656 = vpop.f32.mrf.mxu0
        %v1657 = vadd.f32 %v1544, %v1656
        %1658 = vmatmul.f32.gmra.mxu0 %v1011
        %v1659 = vpop.f32.mrf.mxu0
        %v1660 = vadd.f32 %v1547, %v1659
        %1661 = vmatmul.f32.gmra.mxu0 %v1015
        %v1662 = vpop.f32.mrf.mxu0
        %v1663 = vadd.f32 %v1550, %v1662
        %1664 = vmatmul.f32.gmra.mxu0 %v1019
        %v1665 = vpop.f32.mrf.mxu0
        %v1666 = vadd.f32 %v1553, %v1665
        %1667 = vdwg.mxu0
        %1668 = vst [vmem:[%s323] sm:$0xff] %v1573
        %1669 = vst [vmem:[%s323 + $0x8] sm:$0xff] %v1576
        %1670 = vst [vmem:[%s323 + $0x10] sm:$0xff] %v1579
        %1671 = vst [vmem:[%s323 + $0x18] sm:$0xff] %v1582
        %1672 = vst [vmem:[%s323 + $0x20] sm:$0xff] %v1585
        %1673 = vst [vmem:[%s323 + $0x28] sm:$0xff] %v1588
        %1674 = vst [vmem:[%s323 + $0x30] sm:$0xff] %v1591
        %1675 = vst [vmem:[%s323 + $0x38] sm:$0xff] %v1594
        %1676 = vst [vmem:[%s323 + $0x40] sm:$0xff] %v1597
        %1677 = vst [vmem:[%s323 + $0x48] sm:$0xff] %v1600
        %1678 = vst [vmem:[%s323 + $0x50] sm:$0xff] %v1603
        %1679 = vst [vmem:[%s323 + $0x58] sm:$0xff] %v1606
        %1680 = vst [vmem:[%s323 + $0x60] sm:$0xff] %v1609
        %1681 = vst [vmem:[%s323 + $0x68] sm:$0xff] %v1612
        %1682 = vst [vmem:[%s323 + $0x70] sm:$0xff] %v1615
        %1683 = vst [vmem:[%s323 + $0x78] sm:$0xff] %v1618
        %1684 = vst [vmem:[%s323 + $0x80] sm:$0xff] %v1621
        %1685 = vst [vmem:[%s323 + $0x88] sm:$0xff] %v1624
        %1686 = vst [vmem:[%s323 + $0x90] sm:$0xff] %v1627
        %1687 = vst [vmem:[%s323 + $0x98] sm:$0xff] %v1630
        %1688 = vst [vmem:[%s323 + $0xa0] sm:$0xff] %v1633
        %1689 = vst [vmem:[%s323 + $0xa8] sm:$0xff] %v1636
        %1690 = vst [vmem:[%s323 + $0xb0] sm:$0xff] %v1639
        %1691 = vst [vmem:[%s323 + $0xb8] sm:$0xff] %v1642
        %1692 = vst [vmem:[%s323 + $0xc0] sm:$0xff] %v1645
        %1693 = vst [vmem:[%s323 + $0xc8] sm:$0xff] %v1648
        %1694 = vst [vmem:[%s323 + $0xd0] sm:$0xff] %v1651
        %1695 = vst [vmem:[%s323 + $0xd8] sm:$0xff] %v1654
        %1696 = vst [vmem:[%s323 + $0xe0] sm:$0xff] %v1657
        %1697 = vst [vmem:[%s323 + $0xe8] sm:$0xff] %v1660
        %1698 = vst [vmem:[%s323 + $0xf0] sm:$0xff] %v1663
        %1699 = vst [vmem:[%s323 + $0xf8] sm:$0xff] %v1666
        %s1700 = sand.u32 %s147, 1
        %s1701 = scalar_lea.sflag [#allocation4], %s1700
        %s1702 = sand.u32 %s147, 1
        %s1703 = smul.addr %s1702, 256
        %s1704 = scalar_lea.vmem [#allocation10], %s1703
        %s1705 = sand.u32 %s173, 1
        %s1706 = scalar_lea.sflag [#allocation12], %s1705
        %s1707 = sand.u32 %s173, 1
        %s1708 = smul.addr %s1707, 1024
        %s1709 = scalar_lea.vmem [#allocation11], %s1708
        // Predicated region
        $region57: #{tpu_custom_call.1} parent=39 // pred_check
          %p1710 = pneg %p157
        $region58: #{tpu_custom_call.1} parent=39 // pred_check_branch
          %1712 = sbr.rel (%p1710) target = $region60
        $region59: #{tpu_custom_call.1} parent=39 // pred_region
          %s1713 = smul.u32 32, %s29
          %1715 = vsyncadd %s1701, 0
          %s1716 = smul.addr %s1713, 8
          %s1717 = scalar_lea.hbm %s5, %s1716
          %s1718 = sshll.u32 %s1704, 4
          %s1719 = int_to_ptr.vmem [resolvable:$true] %s1718
          %s1720 = sshll.u32 %s1717, 4
          %s1721 = int_to_ptr.hbm [resolvable:$true] %s1720
          %1726 = dma.vmem_to_hbm [thread:$0]  %s1719, 4096, %s1721, %s1701, 128, 128, 8
        $region60: #{tpu_custom_call.1} parent=39 // pred_fallthru
          _
        // Predicated region
        $region61: #{tpu_custom_call.1} parent=39 // pred_check
          %p1727 = pneg %p183
        $region62: #{tpu_custom_call.1} parent=39 // pred_check_branch
          %1729 = sbr.rel (%p1727) target = $region64
        $region63: #{tpu_custom_call.1} parent=39 // pred_region
          %s1730 = smul.u32 32, %s29
          %1732 = vsyncadd %s1706, 0
          %s1733 = smul.addr %s1730, 4
          %s1734 = smul.addr %s1733, 8
          %s1735 = scalar_lea.hbm %s6, %s1734
          %s1736 = sshll.u32 %s1709, 4
          %s1737 = int_to_ptr.vmem [resolvable:$true] %s1736
          %s1738 = sshll.u32 %s1735, 4
          %s1739 = int_to_ptr.hbm [resolvable:$true] %s1738
          %1744 = dma.vmem_to_hbm [thread:$0]  %s1737, 16384, %s1739, %s1706, 512, 512, 32
        $region64: #{tpu_custom_call.1} parent=39 // pred_fallthru
          _
      $region40: #{tpu_custom_call.1} parent=5 // pred_fallthru
        _
      %p1745 = scmp.le.s32.totalorder 2, %s24
      // Predicated region
      $region65: #{tpu_custom_call.1} parent=5 // pred_check
        %p1746 = pneg %p1745
      $region66: #{tpu_custom_call.1} parent=5 // pred_check_branch
        %1748 = sbr.rel (%p1746) target = $region68
      $region67: #{tpu_custom_call.1} parent=5 // pred_region
        %s1749 = ssub.s32 %s24, 2
        // Predicated region
        $region69: #{tpu_custom_call.1} parent=67 // pred_check
          %p1750 = pneg %p163
        $region70: #{tpu_custom_call.1} parent=67 // pred_check_branch
          %1752 = sbr.rel (%p1750) target = $region72
        $region71: #{tpu_custom_call.1} parent=67 // pred_region
          %s1753 = sand.u32 %s148, 1
          %s1754 = scalar_lea.sflag [#allocation4], %s1753
          %s1755 = sand.u32 %s148, 1
          %s1756 = smul.addr %s1755, 256
          %s1757 = scalar_lea.vmem [#allocation10], %s1756
          %1759 = dma.done %s1754, 4096
        $region72: #{tpu_custom_call.1} parent=67 // pred_fallthru
          _
        // Predicated region
        $region73: #{tpu_custom_call.1} parent=67 // pred_check
          %p1760 = pneg %p189
        $region74: #{tpu_custom_call.1} parent=67 // pred_check_branch
          %1762 = sbr.rel (%p1760) target = $region76
        $region75: #{tpu_custom_call.1} parent=67 // pred_region
          %s1763 = sand.u32 %s174, 1
          %s1764 = scalar_lea.sflag [#allocation12], %s1763
          %s1765 = sand.u32 %s174, 1
          %s1766 = smul.addr %s1765, 1024
          %s1767 = scalar_lea.vmem [#allocation11], %s1766
          %1769 = dma.done %s1764, 16384
        $region76: #{tpu_custom_call.1} parent=67 // pred_fallthru
          _
      $region68: #{tpu_custom_call.1} parent=5 // pred_fallthru
        _
    $region6: #{tpu_custom_call.1} parent=1 // loop_footer
      %s28 = sadd.s32 1, %s24
    $region7: #{tpu_custom_call.1} parent=1 // loop_footer_branch
      %23 = sbr.rel target = $region3
    $region8: #{tpu_custom_call.1} parent=1 // loop_exit
      _
    %1770 = vsyncpa [#allocation3], 1
    %s1771 = scalar_lea.sflag [#allocation3], 1
    %1772 = vsyncpa %s1771, 1
    %1773 = vsyncpa [#allocation6], 1
    %1774 = vsyncpa [#allocation9], 1
    %1775 = vsyncpa [#allocation4], 1
    %s1776 = scalar_lea.sflag [#allocation4], 1
    %1777 = vsyncpa %s1776, 1
    %1778 = vsyncpa [#allocation12], 1
    %s1779 = scalar_lea.sflag [#allocation12], 1
    %1780 = vsyncpa %s1779, 1

</llo_original>
